<compile_context>
chip_gen: v6e
topology: v6e:2x2x1
jax: 0.10.0
libtpu: 0.0.40
codegen_flags: <defaults>
</compile_context>

<pallas_src>
import functools

import jax
import jax.numpy as jnp
import numpy as np
from jax import lax
from jax.experimental import pallas as pl
from jax.experimental.pallas import tpu as pltpu


def _fusion0_kernel(x_ref, m_ref, w_ref, b_ref, o_ref, patches_ref, *, C, W, L):
    """One fused forward pass over a lane-block of L pixels.

    x_ref:       (C, L)        f32  activations, channels on sublanes, pixels on lanes
    m_ref:       (9, L)        f32  precomputed 3x3 border-validity masks (one row per tap)
    w_ref:       (4, C, 9*C)   bf16 per-layer packed weights
    b_ref:       (4, C, 1)     f32  per-layer biases
    o_ref:       (C, L)        f32  output (rows >= c_fuse are zero padding)
    patches_ref: (9*C, L)      f32  VMEM scratch: im2col matrix, rebuilt per layer
    """
    taps = [(oy, ox) for oy in (-1, 0, 1) for ox in (-1, 0, 1)]
    x = x_ref[...]                                     # (C, L) f32

    for l in range(4):                                 # 4 uniform conv+ReLU layers
        # --- im2col via 9 lane-rolls + border masks (full 8-sublane stripes) ---
        for t, (oy, ox) in enumerate(taps):
            s = oy * W + ox                            # flat-index shift of this tap
            if s == 0:
                # center tap: mask is all ones, no roll needed
                patches_ref[t * C:(t + 1) * C, :] = x
            else:
                shifted = pltpu.roll(x, (-s) % L, axis=1)
                patches_ref[t * C:(t + 1) * C, :] = shifted * m_ref[t:t + 1, :]

        # --- one MXU matmul per layer: bf16 operands, f32 accumulation ---------
        p = patches_ref[...].astype(jnp.bfloat16)      # (9*C, L)
        y = jnp.dot(w_ref[l], p, preferred_element_type=jnp.float32)
        x = jnp.maximum(y + b_ref[l], 0.0)             # bias + ReLU

    o_ref[...] = x


def _round_up(x, m):
    return (x + m - 1) // m * m


def _num_batch_blocks(n):
    """v7x has 2 TensorCores -> split the batch across a parallel grid axis when
    possible; v5e/v6e are single-core, where one fat grid step (batch folded onto
    the lane axis) minimizes per-step overhead."""
    try:
        kind = jax.devices()[0].device_kind.lower()
    except Exception:
        kind = ""
    two_core = ("v7" in kind) or ("7x" in kind)
    return 2 if (two_core and n >= 2 and n % 2 == 0) else 1


def _pack_layer_w(C, entries):
    """entries: list of (w_hwio (3,3,cin,cout), cin_off, cout_off) -> (C, 9*C) slab.
    Column index = tap*C + (cin_off + cin); row index = cout_off + cout."""
    slab = jnp.zeros((C, 9, C), jnp.float32)
    for w, cin_off, cout_off in entries:
        cin, cout = w.shape[2], w.shape[3]
        wt = jnp.transpose(w, (3, 0, 1, 2)).reshape(cout, 9, cin)  # (cout, tap, cin)
        slab = slab.at[cout_off:cout_off + cout, :, cin_off:cin_off + cin].add(wt)
    return slab.reshape(C, 9 * C)


def _pack_layer_b(C, entries):
    v = jnp.zeros((C,), jnp.float32)
    for b, off in entries:
        v = v.at[off:off + b.shape[0]].set(b)
    return v


@jax.jit
def fusion0_forward(params, rgb_nchw, sparse_nchw):
    N, c_rgb, H, W = rgb_nchw.shape
    c_sp = sparse_nchw.shape[1]
    HW = H * W
    if c_rgb != c_sp:
        raise ValueError("residual add requires rgb_channels == sparse_channels")
    if HW % 128 != 0:
        raise ValueError("H*W must be a multiple of 128 for the lane-dense layout")
    # TODO(synk): the flat-HW roll im2col assumes the whole image rides the lane
    # axis; spatially tiling H*W (large images / v7x 64MiB VMEM) needs row halos.

    w_rgb, b_rgb = params["rgb_conv"]
    w_sp, b_sp = params["sparse_conv"]
    w2, b2 = params["fuse_conv2"]
    w3, b3 = params["fuse_conv3"]
    w4, b4 = params["fuse_conv4"]
    c_fuse = w4.shape[3]
    ct = c_rgb + c_sp
    C = _round_up(max(ct, c_fuse), 8)         # uniform padded channel count

    # ---- activations: (C, N*HW), channels on sublanes, pixels on lanes --------
    x = jnp.concatenate(
        [rgb_nchw.astype(jnp.float32).reshape(N, c_rgb, HW),
         sparse_nchw.astype(jnp.float32).reshape(N, c_sp, HW)], axis=1)
    if ct < C:
        x = jnp.concatenate([x, jnp.zeros((N, C - ct, HW), jnp.float32)], axis=1)
    x_all = jnp.transpose(x, (1, 0, 2)).reshape(C, N * HW)

    # ---- one bf16 weight slab + one f32 bias slab ------------------------------
    # layer0: rgb_conv & sparse_conv block-diagonal; layer1: fuse_conv2 with the
    # residual add folded in (same W2 on both cin blocks); layer2/3: fuse_conv3/4.
    # cout is zero-padded to C so every layer is the same (C,9C)@(9C,L) matmul.
    w_all = jnp.stack([
        _pack_layer_w(C, [(w_rgb, 0, 0), (w_sp, c_rgb, c_rgb)]),
        _pack_layer_w(C, [(w2, 0, 0), (w2, c_rgb, 0)]),
        _pack_layer_w(C, [(w3, 0, 0)]),
        _pack_layer_w(C, [(w4, 0, 0)]),
    ], axis=0).astype(jnp.bfloat16)                        # (4, C, 9*C)
    b_all = jnp.stack([
        _pack_layer_b(C, [(b_rgb, 0), (b_sp, c_rgb)]),
        _pack_layer_b(C, [(b2, 0)]),
        _pack_layer_b(C, [(b3, 0)]),
        _pack_layer_b(C, [(b4, 0)]),
    ], axis=0).reshape(4, C, 1)                            # (4, C, 1)

    # ---- grid: fold batch onto lanes; split into 2 parallel blocks on v7x ------
    B = _num_batch_blocks(N)
    spb = N // B                                           # samples per grid block
    L = spb * HW                                           # lane width per block

    # ---- 3x3 border-validity masks (trace-time numpy constant) -----------------
    lane = np.arange(L)
    row = (lane % HW) // W
    col = lane % W
    m = np.stack([((row + oy >= 0) & (row + oy < H) &
                   (col + ox >= 0) & (col + ox < W)).astype(np.float32)
                  for oy in (-1, 0, 1) for ox in (-1, 0, 1)])
    masks = jnp.asarray(m)                                 # (9, L)

    kernel = functools.partial(_fusion0_kernel, C=C, W=W, L=L)
    out = pl.pallas_call(
        kernel,
        out_shape=jax.ShapeDtypeStruct((C, N * HW), jnp.float32),
        grid_spec=pltpu.PrefetchScalarGridSpec(
            num_scalar_prefetch=0,
            grid=(B,),
            in_specs=[
                pl.BlockSpec((C, L), lambda b: (0, b)),            # activations
                pl.BlockSpec((9, L), lambda b: (0, 0)),            # tap masks
                pl.BlockSpec((4, C, 9 * C), lambda b: (0, 0, 0)),  # weight slab
                pl.BlockSpec((4, C, 1), lambda b: (0, 0, 0)),      # bias slab
            ],
            out_specs=pl.BlockSpec((C, L), lambda b: (0, b)),
            scratch_shapes=[pltpu.VMEM((9 * C, L), jnp.float32)],  # im2col scratch
        ),
        compiler_params=pltpu.CompilerParams(
            dimension_semantics=("parallel",)),
    )(x_all, masks, w_all, b_all)

    out = out[:c_fuse].reshape(c_fuse, N, H, W)
    return jnp.transpose(out, (1, 0, 2, 3))


def _init_conv_params(key, cin, cout):
    kw, kb = jax.random.split(key)
    # deterministic He-style init (synthetic weights, not a checkpoint)
    w = jax.random.normal(kw, (3, 3, cin, cout), jnp.float32) * (
        1.0 / np.sqrt(9.0 * cin))
    b = jax.random.normal(kb, (cout,), jnp.float32) * 0.01
    return w, b


def make_fusion0_params(key, rgb_channels, sparse_channels, fusion_channels):
    ks = jax.random.split(key, 5)
    return {
        "rgb_conv":    _init_conv_params(ks[0], rgb_channels, rgb_channels),
        "sparse_conv": _init_conv_params(ks[1], sparse_channels, sparse_channels),
        "fuse_conv2":  _init_conv_params(ks[2], sparse_channels, sparse_channels),
        "fuse_conv3":  _init_conv_params(ks[3], sparse_channels, fusion_channels),
        "fuse_conv4":  _init_conv_params(ks[4], fusion_channels, fusion_channels),
    }


# -------------------- pure-JAX reference for verification --------------------
def _ref_conv3x3_relu(x_nhwc, w_hwio, b):
    y = lax.conv_general_dilated(
        x_nhwc, w_hwio, window_strides=(1, 1), padding=((1, 1), (1, 1)),
        dimension_numbers=("NHWC", "HWIO", "NHWC"))
    return jnp.maximum(y + b, 0.0)


def _ref_forward(params, rgb_nchw, sparse_nchw):
    rgb = jnp.transpose(rgb_nchw, (0, 2, 3, 1)).astype(jnp.float32)
    sparse = jnp.transpose(sparse_nchw, (0, 2, 3, 1)).astype(jnp.float32)
    rgb_feat = _ref_conv3x3_relu(rgb, *params["rgb_conv"])
    sparse_feat = _ref_conv3x3_relu(sparse, *params["sparse_conv"])
    fused = _ref_conv3x3_relu(rgb_feat + sparse_feat, *params["fuse_conv2"])
    fused = _ref_conv3x3_relu(fused, *params["fuse_conv3"])
    fused = _ref_conv3x3_relu(fused, *params["fuse_conv4"])
    return jnp.transpose(fused, (0, 3, 1, 2))


if __name__ == "__main__":
    key = jax.random.PRNGKey(0)
    k_params, k_rgb, k_sparse = jax.random.split(key, 3)

    N, H, W = 2, 16, 16
    rgb_channels = 4
    sparse_channels = 4   # must equal rgb_channels for the residual add
    fusion_channels = 8

    params = make_fusion0_params(k_params, rgb_channels, sparse_channels,
                                 fusion_channels)
    rgb = jax.random.normal(k_rgb, (N, rgb_channels, H, W), jnp.float32)
    sparse = jax.random.normal(k_sparse, (N, sparse_channels, H, W), jnp.float32)

    out = fusion0_forward(params, rgb, sparse)
    out = jax.block_until_ready(out)

    ref = jax.block_until_ready(_ref_forward(params, rgb, sparse))
    assert out.shape == (N, fusion_channels, H, W)
    # Tolerance sized for bf16 MXU operands (f32 accumulation) vs the f32
    # reference; structural bugs (wrong mask/shift/packing) produce O(1) errors.
    np.testing.assert_allclose(np.asarray(out), np.asarray(ref),
                               rtol=5e-2, atol=5e-2)
    print("KERNEL_OK")
</pallas_src>

<mosaic_0001>
module attributes {stable_mosaic.version = 11 : i64} {
  func.func @_fusion0_kernel(%arg0: i32, %arg1: memref<8x512xf32, #tpu.memory_space<vmem>>, %arg2: memref<9x512xf32, #tpu.memory_space<vmem>>, %arg3: memref<4x8x72xbf16, #tpu.memory_space<vmem>>, %arg4: memref<4x8x1xf32, #tpu.memory_space<vmem>>, %arg5: memref<8x512xf32, #tpu.memory_space<vmem>>, %arg6: memref<72x512xf32, #tpu.memory_space<vmem>>) attributes {dimension_semantics = [#tpu.dimension_semantics<parallel>], iteration_bounds = array<i64: 1>, scalar_prefetch = 0 : i64, scratch_operands = 1 : i64, tpu.core_type = #tpu.core_type<tc>, window_params = [{transform_indices = @transform_0, window_bounds = array<i64: 8, 512>}, {pipeline_mode = #tpu.pipeline_mode<synchronous>, transform_indices = @transform_1, window_bounds = array<i64: 9, 512>}, {pipeline_mode = #tpu.pipeline_mode<synchronous>, transform_indices = @transform_2, window_bounds = array<i64: 4, 8, 72>}, {pipeline_mode = #tpu.pipeline_mode<synchronous>, transform_indices = @transform_3, window_bounds = array<i64: 4, 8, 1>}, {transform_indices = @transform_4, window_bounds = array<i64: 8, 512>}]} {
    %c0 = arith.constant 0 : index
    %c0_0 = arith.constant 0 : index
    %0 = vector.load %arg1[%c0, %c0_0] : memref<8x512xf32, #tpu.memory_space<vmem>>, vector<8x512xf32>
    %c17_i32 = arith.constant 17 : i32
    %1 = tpu.dynamic_rotate %0 by %c17_i32 dim 1 : vector<8x512xf32>, i32 -> vector<8x512xf32>
    %c0_1 = arith.constant 0 : index
    %c0_2 = arith.constant 0 : index
    %2 = vector.load %arg2[%c0_1, %c0_2] : memref<9x512xf32, #tpu.memory_space<vmem>>, vector<1x512xf32>
    %3 = vector.broadcast %2 : vector<1x512xf32> to vector<8x512xf32>
    %4 = arith.mulf %1, %3 : vector<8x512xf32>
    %c0_3 = arith.constant 0 : index
    %c0_4 = arith.constant 0 : index
    %5 = vector.load %arg6[%c0_3, %c0_4] : memref<72x512xf32, #tpu.memory_space<vmem>>, vector<8x512xf32>
    tpu.vector_store %arg6[%c0_3, %c0_4], %4 {strides = array<i32>} : memref<72x512xf32, #tpu.memory_space<vmem>>, vector<8x512xf32>,
    %c16_i32 = arith.constant 16 : i32
    %6 = tpu.dynamic_rotate %0 by %c16_i32 dim 1 : vector<8x512xf32>, i32 -> vector<8x512xf32>
    %c1 = arith.constant 1 : index
    %c0_5 = arith.constant 0 : index
    %7 = vector.load %arg2[%c1, %c0_5] : memref<9x512xf32, #tpu.memory_space<vmem>>, vector<1x512xf32>
    %8 = vector.broadcast %7 : vector<1x512xf32> to vector<8x512xf32>
    %9 = arith.mulf %6, %8 : vector<8x512xf32>
    %c8 = arith.constant 8 : index
    %c0_6 = arith.constant 0 : index
    %10 = vector.load %arg6[%c8, %c0_6] : memref<72x512xf32, #tpu.memory_space<vmem>>, vector<8x512xf32>
    tpu.vector_store %arg6[%c8, %c0_6], %9 {strides = array<i32>} : memref<72x512xf32, #tpu.memory_space<vmem>>, vector<8x512xf32>,
    %c15_i32 = arith.constant 15 : i32
    %11 = tpu.dynamic_rotate %0 by %c15_i32 dim 1 : vector<8x512xf32>, i32 -> vector<8x512xf32>
    %c2 = arith.constant 2 : index
    %c0_7 = arith.constant 0 : index
    %12 = vector.load %arg2[%c2, %c0_7] : memref<9x512xf32, #tpu.memory_space<vmem>>, vector<1x512xf32>
    %13 = vector.broadcast %12 : vector<1x512xf32> to vector<8x512xf32>
    %14 = arith.mulf %11, %13 : vector<8x512xf32>
    %c16 = arith.constant 16 : index
    %c0_8 = arith.constant 0 : index
    %15 = vector.load %arg6[%c16, %c0_8] : memref<72x512xf32, #tpu.memory_space<vmem>>, vector<8x512xf32>
    tpu.vector_store %arg6[%c16, %c0_8], %14 {strides = array<i32>} : memref<72x512xf32, #tpu.memory_space<vmem>>, vector<8x512xf32>,
    %c1_i32 = arith.constant 1 : i32
    %16 = tpu.dynamic_rotate %0 by %c1_i32 dim 1 : vector<8x512xf32>, i32 -> vector<8x512xf32>
    %c3 = arith.constant 3 : index
    %c0_9 = arith.constant 0 : index
    %17 = vector.load %arg2[%c3, %c0_9] : memref<9x512xf32, #tpu.memory_space<vmem>>, vector<1x512xf32>
    %18 = vector.broadcast %17 : vector<1x512xf32> to vector<8x512xf32>
    %19 = arith.mulf %16, %18 : vector<8x512xf32>
    %c24 = arith.constant 24 : index
    %c0_10 = arith.constant 0 : index
    %20 = vector.load %arg6[%c24, %c0_10] : memref<72x512xf32, #tpu.memory_space<vmem>>, vector<8x512xf32>
    tpu.vector_store %arg6[%c24, %c0_10], %19 {strides = array<i32>} : memref<72x512xf32, #tpu.memory_space<vmem>>, vector<8x512xf32>,
    %c32 = arith.constant 32 : index
    %c0_11 = arith.constant 0 : index
    %21 = vector.load %arg6[%c32, %c0_11] : memref<72x512xf32, #tpu.memory_space<vmem>>, vector<8x512xf32>
    tpu.vector_store %arg6[%c32, %c0_11], %0 {strides = array<i32>} : memref<72x512xf32, #tpu.memory_space<vmem>>, vector<8x512xf32>,
    %c511_i32 = arith.constant 511 : i32
    %22 = tpu.dynamic_rotate %0 by %c511_i32 dim 1 : vector<8x512xf32>, i32 -> vector<8x512xf32>
    %c5 = arith.constant 5 : index
    %c0_12 = arith.constant 0 : index
    %23 = vector.load %arg2[%c5, %c0_12] : memref<9x512xf32, #tpu.memory_space<vmem>>, vector<1x512xf32>
    %24 = vector.broadcast %23 : vector<1x512xf32> to vector<8x512xf32>
    %25 = arith.mulf %22, %24 : vector<8x512xf32>
    %c40 = arith.constant 40 : index
    %c0_13 = arith.constant 0 : index
    %26 = vector.load %arg6[%c40, %c0_13] : memref<72x512xf32, #tpu.memory_space<vmem>>, vector<8x512xf32>
    tpu.vector_store %arg6[%c40, %c0_13], %25 {strides = array<i32>} : memref<72x512xf32, #tpu.memory_space<vmem>>, vector<8x512xf32>,
    %c497_i32 = arith.constant 497 : i32
    %27 = tpu.dynamic_rotate %0 by %c497_i32 dim 1 : vector<8x512xf32>, i32 -> vector<8x512xf32>
    %c6 = arith.constant 6 : index
    %c0_14 = arith.constant 0 : index
    %28 = vector.load %arg2[%c6, %c0_14] : memref<9x512xf32, #tpu.memory_space<vmem>>, vector<1x512xf32>
    %29 = vector.broadcast %28 : vector<1x512xf32> to vector<8x512xf32>
    %30 = arith.mulf %27, %29 : vector<8x512xf32>
    %c48 = arith.constant 48 : index
    %c0_15 = arith.constant 0 : index
    %31 = vector.load %arg6[%c48, %c0_15] : memref<72x512xf32, #tpu.memory_space<vmem>>, vector<8x512xf32>
    tpu.vector_store %arg6[%c48, %c0_15], %30 {strides = array<i32>} : memref<72x512xf32, #tpu.memory_space<vmem>>, vector<8x512xf32>,
    %c496_i32 = arith.constant 496 : i32
    %32 = tpu.dynamic_rotate %0 by %c496_i32 dim 1 : vector<8x512xf32>, i32 -> vector<8x512xf32>
    %c7 = arith.constant 7 : index
    %c0_16 = arith.constant 0 : index
    %33 = vector.load %arg2[%c7, %c0_16] : memref<9x512xf32, #tpu.memory_space<vmem>>, vector<1x512xf32>
    %34 = vector.broadcast %33 : vector<1x512xf32> to vector<8x512xf32>
    %35 = arith.mulf %32, %34 : vector<8x512xf32>
    %c56 = arith.constant 56 : index
    %c0_17 = arith.constant 0 : index
    %36 = vector.load %arg6[%c56, %c0_17] : memref<72x512xf32, #tpu.memory_space<vmem>>, vector<8x512xf32>
    tpu.vector_store %arg6[%c56, %c0_17], %35 {strides = array<i32>} : memref<72x512xf32, #tpu.memory_space<vmem>>, vector<8x512xf32>,
    %c495_i32 = arith.constant 495 : i32
    %37 = tpu.dynamic_rotate %0 by %c495_i32 dim 1 : vector<8x512xf32>, i32 -> vector<8x512xf32>
    %c8_18 = arith.constant 8 : index
    %c0_19 = arith.constant 0 : index
    %38 = vector.load %arg2[%c8_18, %c0_19] : memref<9x512xf32, #tpu.memory_space<vmem>>, vector<1x512xf32>
    %39 = vector.broadcast %38 : vector<1x512xf32> to vector<8x512xf32>
    %40 = arith.mulf %37, %39 : vector<8x512xf32>
    %c64 = arith.constant 64 : index
    %c0_20 = arith.constant 0 : index
    %41 = vector.load %arg6[%c64, %c0_20] : memref<72x512xf32, #tpu.memory_space<vmem>>, vector<8x512xf32>
    tpu.vector_store %arg6[%c64, %c0_20], %40 {strides = array<i32>} : memref<72x512xf32, #tpu.memory_space<vmem>>, vector<8x512xf32>,
    %c0_21 = arith.constant 0 : index
    %c0_22 = arith.constant 0 : index
    %42 = vector.load %arg6[%c0_21, %c0_22] : memref<72x512xf32, #tpu.memory_space<vmem>>, vector<72x512xf32>
    %43 = arith.truncf %42 : vector<72x512xf32> to vector<72x512xbf16>
    %c0_23 = arith.constant 0 : index
    %c0_24 = arith.constant 0 : index
    %c0_25 = arith.constant 0 : index
    %44 = vector.load %arg3[%c0_23, %c0_24, %c0_25] : memref<4x8x72xbf16, #tpu.memory_space<vmem>>, vector<1x8x72xbf16>
    %45 = vector.shape_cast %44 : vector<1x8x72xbf16> to vector<8x72xbf16>
    %cst = arith.constant dense<0.000000e+00> : vector<8x512xf32>
    %46 = tpu.matmul %45, %43, %cst {dimension_numbers = #tpu.dot_dimension_numbers<[1], [0], [0], [1], [0, 0, 1, 1], [], []>} : vector<8x72xbf16>, vector<72x512xbf16>, vector<8x512xf32> -> vector<8x512xf32>
    %c0_26 = arith.constant 0 : index
    %c0_27 = arith.constant 0 : index
    %c0_28 = arith.constant 0 : index
    %47 = vector.load %arg4[%c0_26, %c0_27, %c0_28] : memref<4x8x1xf32, #tpu.memory_space<vmem>>, vector<1x8x1xf32>
    %48 = vector.shape_cast %47 : vector<1x8x1xf32> to vector<8x1xf32>
    %49 = vector.broadcast %48 : vector<8x1xf32> to vector<8x512xf32>
    %50 = arith.addf %46, %49 : vector<8x512xf32>
    %cst_29 = arith.constant 0.000000e+00 : f32
    %51 = vector.broadcast %cst_29 : f32 to vector<8x512xf32>
    %52 = arith.maximumf %50, %51 : vector<8x512xf32>
    %c17_i32_30 = arith.constant 17 : i32
    %53 = tpu.dynamic_rotate %52 by %c17_i32_30 dim 1 : vector<8x512xf32>, i32 -> vector<8x512xf32>
    %c0_31 = arith.constant 0 : index
    %c0_32 = arith.constant 0 : index
    %54 = vector.load %arg2[%c0_31, %c0_32] : memref<9x512xf32, #tpu.memory_space<vmem>>, vector<1x512xf32>
    %55 = vector.broadcast %54 : vector<1x512xf32> to vector<8x512xf32>
    %56 = arith.mulf %53, %55 : vector<8x512xf32>
    %c0_33 = arith.constant 0 : index
    %c0_34 = arith.constant 0 : index
    %57 = vector.load %arg6[%c0_33, %c0_34] : memref<72x512xf32, #tpu.memory_space<vmem>>, vector<8x512xf32>
    tpu.vector_store %arg6[%c0_33, %c0_34], %56 {strides = array<i32>} : memref<72x512xf32, #tpu.memory_space<vmem>>, vector<8x512xf32>,
    %c16_i32_35 = arith.constant 16 : i32
    %58 = tpu.dynamic_rotate %52 by %c16_i32_35 dim 1 : vector<8x512xf32>, i32 -> vector<8x512xf32>
    %c1_36 = arith.constant 1 : index
    %c0_37 = arith.constant 0 : index
    %59 = vector.load %arg2[%c1_36, %c0_37] : memref<9x512xf32, #tpu.memory_space<vmem>>, vector<1x512xf32>
    %60 = vector.broadcast %59 : vector<1x512xf32> to vector<8x512xf32>
    %61 = arith.mulf %58, %60 : vector<8x512xf32>
    %c8_38 = arith.constant 8 : index
    %c0_39 = arith.constant 0 : index
    %62 = vector.load %arg6[%c8_38, %c0_39] : memref<72x512xf32, #tpu.memory_space<vmem>>, vector<8x512xf32>
    tpu.vector_store %arg6[%c8_38, %c0_39], %61 {strides = array<i32>} : memref<72x512xf32, #tpu.memory_space<vmem>>, vector<8x512xf32>,
    %c15_i32_40 = arith.constant 15 : i32
    %63 = tpu.dynamic_rotate %52 by %c15_i32_40 dim 1 : vector<8x512xf32>, i32 -> vector<8x512xf32>
    %c2_41 = arith.constant 2 : index
    %c0_42 = arith.constant 0 : index
    %64 = vector.load %arg2[%c2_41, %c0_42] : memref<9x512xf32, #tpu.memory_space<vmem>>, vector<1x512xf32>
    %65 = vector.broadcast %64 : vector<1x512xf32> to vector<8x512xf32>
    %66 = arith.mulf %63, %65 : vector<8x512xf32>
    %c16_43 = arith.constant 16 : index
    %c0_44 = arith.constant 0 : index
    %67 = vector.load %arg6[%c16_43, %c0_44] : memref<72x512xf32, #tpu.memory_space<vmem>>, vector<8x512xf32>
    tpu.vector_store %arg6[%c16_43, %c0_44], %66 {strides = array<i32>} : memref<72x512xf32, #tpu.memory_space<vmem>>, vector<8x512xf32>,
    %c1_i32_45 = arith.constant 1 : i32
    %68 = tpu.dynamic_rotate %52 by %c1_i32_45 dim 1 : vector<8x512xf32>, i32 -> vector<8x512xf32>
    %c3_46 = arith.constant 3 : index
    %c0_47 = arith.constant 0 : index
    %69 = vector.load %arg2[%c3_46, %c0_47] : memref<9x512xf32, #tpu.memory_space<vmem>>, vector<1x512xf32>
    %70 = vector.broadcast %69 : vector<1x512xf32> to vector<8x512xf32>
    %71 = arith.mulf %68, %70 : vector<8x512xf32>
    %c24_48 = arith.constant 24 : index
    %c0_49 = arith.constant 0 : index
    %72 = vector.load %arg6[%c24_48, %c0_49] : memref<72x512xf32, #tpu.memory_space<vmem>>, vector<8x512xf32>
    tpu.vector_store %arg6[%c24_48, %c0_49], %71 {strides = array<i32>} : memref<72x512xf32, #tpu.memory_space<vmem>>, vector<8x512xf32>,
    %c32_50 = arith.constant 32 : index
    %c0_51 = arith.constant 0 : index
    %73 = vector.load %arg6[%c32_50, %c0_51] : memref<72x512xf32, #tpu.memory_space<vmem>>, vector<8x512xf32>
    tpu.vector_store %arg6[%c32_50, %c0_51], %52 {strides = array<i32>} : memref<72x512xf32, #tpu.memory_space<vmem>>, vector<8x512xf32>,
    %c511_i32_52 = arith.constant 511 : i32
    %74 = tpu.dynamic_rotate %52 by %c511_i32_52 dim 1 : vector<8x512xf32>, i32 -> vector<8x512xf32>
    %c5_53 = arith.constant 5 : index
    %c0_54 = arith.constant 0 : index
    %75 = vector.load %arg2[%c5_53, %c0_54] : memref<9x512xf32, #tpu.memory_space<vmem>>, vector<1x512xf32>
    %76 = vector.broadcast %75 : vector<1x512xf32> to vector<8x512xf32>
    %77 = arith.mulf %74, %76 : vector<8x512xf32>
    %c40_55 = arith.constant 40 : index
    %c0_56 = arith.constant 0 : index
    %78 = vector.load %arg6[%c40_55, %c0_56] : memref<72x512xf32, #tpu.memory_space<vmem>>, vector<8x512xf32>
    tpu.vector_store %arg6[%c40_55, %c0_56], %77 {strides = array<i32>} : memref<72x512xf32, #tpu.memory_space<vmem>>, vector<8x512xf32>,
    %c497_i32_57 = arith.constant 497 : i32
    %79 = tpu.dynamic_rotate %52 by %c497_i32_57 dim 1 : vector<8x512xf32>, i32 -> vector<8x512xf32>
    %c6_58 = arith.constant 6 : index
    %c0_59 = arith.constant 0 : index
    %80 = vector.load %arg2[%c6_58, %c0_59] : memref<9x512xf32, #tpu.memory_space<vmem>>, vector<1x512xf32>
    %81 = vector.broadcast %80 : vector<1x512xf32> to vector<8x512xf32>
    %82 = arith.mulf %79, %81 : vector<8x512xf32>
    %c48_60 = arith.constant 48 : index
    %c0_61 = arith.constant 0 : index
    %83 = vector.load %arg6[%c48_60, %c0_61] : memref<72x512xf32, #tpu.memory_space<vmem>>, vector<8x512xf32>
    tpu.vector_store %arg6[%c48_60, %c0_61], %82 {strides = array<i32>} : memref<72x512xf32, #tpu.memory_space<vmem>>, vector<8x512xf32>,
    %c496_i32_62 = arith.constant 496 : i32
    %84 = tpu.dynamic_rotate %52 by %c496_i32_62 dim 1 : vector<8x512xf32>, i32 -> vector<8x512xf32>
    %c7_63 = arith.constant 7 : index
    %c0_64 = arith.constant 0 : index
    %85 = vector.load %arg2[%c7_63, %c0_64] : memref<9x512xf32, #tpu.memory_space<vmem>>, vector<1x512xf32>
    %86 = vector.broadcast %85 : vector<1x512xf32> to vector<8x512xf32>
    %87 = arith.mulf %84, %86 : vector<8x512xf32>
    %c56_65 = arith.constant 56 : index
    %c0_66 = arith.constant 0 : index
    %88 = vector.load %arg6[%c56_65, %c0_66] : memref<72x512xf32, #tpu.memory_space<vmem>>, vector<8x512xf32>
    tpu.vector_store %arg6[%c56_65, %c0_66], %87 {strides = array<i32>} : memref<72x512xf32, #tpu.memory_space<vmem>>, vector<8x512xf32>,
    %c495_i32_67 = arith.constant 495 : i32
    %89 = tpu.dynamic_rotate %52 by %c495_i32_67 dim 1 : vector<8x512xf32>, i32 -> vector<8x512xf32>
    %c8_68 = arith.constant 8 : index
    %c0_69 = arith.constant 0 : index
    %90 = vector.load %arg2[%c8_68, %c0_69] : memref<9x512xf32, #tpu.memory_space<vmem>>, vector<1x512xf32>
    %91 = vector.broadcast %90 : vector<1x512xf32> to vector<8x512xf32>
    %92 = arith.mulf %89, %91 : vector<8x512xf32>
    %c64_70 = arith.constant 64 : index
    %c0_71 = arith.constant 0 : index
    %93 = vector.load %arg6[%c64_70, %c0_71] : memref<72x512xf32, #tpu.memory_space<vmem>>, vector<8x512xf32>
    tpu.vector_store %arg6[%c64_70, %c0_71], %92 {strides = array<i32>} : memref<72x512xf32, #tpu.memory_space<vmem>>, vector<8x512xf32>,
    %c0_72 = arith.constant 0 : index
    %c0_73 = arith.constant 0 : index
    %94 = vector.load %arg6[%c0_72, %c0_73] : memref<72x512xf32, #tpu.memory_space<vmem>>, vector<72x512xf32>
    %95 = arith.truncf %94 : vector<72x512xf32> to vector<72x512xbf16>
    %c1_74 = arith.constant 1 : index
    %c0_75 = arith.constant 0 : index
    %c0_76 = arith.constant 0 : index
    %96 = vector.load %arg3[%c1_74, %c0_75, %c0_76] : memref<4x8x72xbf16, #tpu.memory_space<vmem>>, vector<1x8x72xbf16>
    %97 = vector.shape_cast %96 : vector<1x8x72xbf16> to vector<8x72xbf16>
    %cst_77 = arith.constant dense<0.000000e+00> : vector<8x512xf32>
    %98 = tpu.matmul %97, %95, %cst_77 {dimension_numbers = #tpu.dot_dimension_numbers<[1], [0], [0], [1], [0, 0, 1, 1], [], []>} : vector<8x72xbf16>, vector<72x512xbf16>, vector<8x512xf32> -> vector<8x512xf32>
    %c1_78 = arith.constant 1 : index
    %c0_79 = arith.constant 0 : index
    %c0_80 = arith.constant 0 : index
    %99 = vector.load %arg4[%c1_78, %c0_79, %c0_80] : memref<4x8x1xf32, #tpu.memory_space<vmem>>, vector<1x8x1xf32>
    %100 = vector.shape_cast %99 : vector<1x8x1xf32> to vector<8x1xf32>
    %101 = vector.broadcast %100 : vector<8x1xf32> to vector<8x512xf32>
    %102 = arith.addf %98, %101 : vector<8x512xf32>
    %cst_81 = arith.constant 0.000000e+00 : f32
    %103 = vector.broadcast %cst_81 : f32 to vector<8x512xf32>
    %104 = arith.maximumf %102, %103 : vector<8x512xf32>
    %c17_i32_82 = arith.constant 17 : i32
    %105 = tpu.dynamic_rotate %104 by %c17_i32_82 dim 1 : vector<8x512xf32>, i32 -> vector<8x512xf32>
    %c0_83 = arith.constant 0 : index
    %c0_84 = arith.constant 0 : index
    %106 = vector.load %arg2[%c0_83, %c0_84] : memref<9x512xf32, #tpu.memory_space<vmem>>, vector<1x512xf32>
    %107 = vector.broadcast %106 : vector<1x512xf32> to vector<8x512xf32>
    %108 = arith.mulf %105, %107 : vector<8x512xf32>
    %c0_85 = arith.constant 0 : index
    %c0_86 = arith.constant 0 : index
    %109 = vector.load %arg6[%c0_85, %c0_86] : memref<72x512xf32, #tpu.memory_space<vmem>>, vector<8x512xf32>
    tpu.vector_store %arg6[%c0_85, %c0_86], %108 {strides = array<i32>} : memref<72x512xf32, #tpu.memory_space<vmem>>, vector<8x512xf32>,
    %c16_i32_87 = arith.constant 16 : i32
    %110 = tpu.dynamic_rotate %104 by %c16_i32_87 dim 1 : vector<8x512xf32>, i32 -> vector<8x512xf32>
    %c1_88 = arith.constant 1 : index
    %c0_89 = arith.constant 0 : index
    %111 = vector.load %arg2[%c1_88, %c0_89] : memref<9x512xf32, #tpu.memory_space<vmem>>, vector<1x512xf32>
    %112 = vector.broadcast %111 : vector<1x512xf32> to vector<8x512xf32>
    %113 = arith.mulf %110, %112 : vector<8x512xf32>
    %c8_90 = arith.constant 8 : index
    %c0_91 = arith.constant 0 : index
    %114 = vector.load %arg6[%c8_90, %c0_91] : memref<72x512xf32, #tpu.memory_space<vmem>>, vector<8x512xf32>
    tpu.vector_store %arg6[%c8_90, %c0_91], %113 {strides = array<i32>} : memref<72x512xf32, #tpu.memory_space<vmem>>, vector<8x512xf32>,
    %c15_i32_92 = arith.constant 15 : i32
    %115 = tpu.dynamic_rotate %104 by %c15_i32_92 dim 1 : vector<8x512xf32>, i32 -> vector<8x512xf32>
    %c2_93 = arith.constant 2 : index
    %c0_94 = arith.constant 0 : index
    %116 = vector.load %arg2[%c2_93, %c0_94] : memref<9x512xf32, #tpu.memory_space<vmem>>, vector<1x512xf32>
    %117 = vector.broadcast %116 : vector<1x512xf32> to vector<8x512xf32>
    %118 = arith.mulf %115, %117 : vector<8x512xf32>
    %c16_95 = arith.constant 16 : index
    %c0_96 = arith.constant 0 : index
    %119 = vector.load %arg6[%c16_95, %c0_96] : memref<72x512xf32, #tpu.memory_space<vmem>>, vector<8x512xf32>
    tpu.vector_store %arg6[%c16_95, %c0_96], %118 {strides = array<i32>} : memref<72x512xf32, #tpu.memory_space<vmem>>, vector<8x512xf32>,
    %c1_i32_97 = arith.constant 1 : i32
    %120 = tpu.dynamic_rotate %104 by %c1_i32_97 dim 1 : vector<8x512xf32>, i32 -> vector<8x512xf32>
    %c3_98 = arith.constant 3 : index
    %c0_99 = arith.constant 0 : index
    %121 = vector.load %arg2[%c3_98, %c0_99] : memref<9x512xf32, #tpu.memory_space<vmem>>, vector<1x512xf32>
    %122 = vector.broadcast %121 : vector<1x512xf32> to vector<8x512xf32>
    %123 = arith.mulf %120, %122 : vector<8x512xf32>
    %c24_100 = arith.constant 24 : index
    %c0_101 = arith.constant 0 : index
    %124 = vector.load %arg6[%c24_100, %c0_101] : memref<72x512xf32, #tpu.memory_space<vmem>>, vector<8x512xf32>
    tpu.vector_store %arg6[%c24_100, %c0_101], %123 {strides = array<i32>} : memref<72x512xf32, #tpu.memory_space<vmem>>, vector<8x512xf32>,
    %c32_102 = arith.constant 32 : index
    %c0_103 = arith.constant 0 : index
    %125 = vector.load %arg6[%c32_102, %c0_103] : memref<72x512xf32, #tpu.memory_space<vmem>>, vector<8x512xf32>
    tpu.vector_store %arg6[%c32_102, %c0_103], %104 {strides = array<i32>} : memref<72x512xf32, #tpu.memory_space<vmem>>, vector<8x512xf32>,
    %c511_i32_104 = arith.constant 511 : i32
    %126 = tpu.dynamic_rotate %104 by %c511_i32_104 dim 1 : vector<8x512xf32>, i32 -> vector<8x512xf32>
    %c5_105 = arith.constant 5 : index
    %c0_106 = arith.constant 0 : index
    %127 = vector.load %arg2[%c5_105, %c0_106] : memref<9x512xf32, #tpu.memory_space<vmem>>, vector<1x512xf32>
    %128 = vector.broadcast %127 : vector<1x512xf32> to vector<8x512xf32>
    %129 = arith.mulf %126, %128 : vector<8x512xf32>
    %c40_107 = arith.constant 40 : index
    %c0_108 = arith.constant 0 : index
    %130 = vector.load %arg6[%c40_107, %c0_108] : memref<72x512xf32, #tpu.memory_space<vmem>>, vector<8x512xf32>
    tpu.vector_store %arg6[%c40_107, %c0_108], %129 {strides = array<i32>} : memref<72x512xf32, #tpu.memory_space<vmem>>, vector<8x512xf32>,
    %c497_i32_109 = arith.constant 497 : i32
    %131 = tpu.dynamic_rotate %104 by %c497_i32_109 dim 1 : vector<8x512xf32>, i32 -> vector<8x512xf32>
    %c6_110 = arith.constant 6 : index
    %c0_111 = arith.constant 0 : index
    %132 = vector.load %arg2[%c6_110, %c0_111] : memref<9x512xf32, #tpu.memory_space<vmem>>, vector<1x512xf32>
    %133 = vector.broadcast %132 : vector<1x512xf32> to vector<8x512xf32>
    %134 = arith.mulf %131, %133 : vector<8x512xf32>
    %c48_112 = arith.constant 48 : index
    %c0_113 = arith.constant 0 : index
    %135 = vector.load %arg6[%c48_112, %c0_113] : memref<72x512xf32, #tpu.memory_space<vmem>>, vector<8x512xf32>
    tpu.vector_store %arg6[%c48_112, %c0_113], %134 {strides = array<i32>} : memref<72x512xf32, #tpu.memory_space<vmem>>, vector<8x512xf32>,
    %c496_i32_114 = arith.constant 496 : i32
    %136 = tpu.dynamic_rotate %104 by %c496_i32_114 dim 1 : vector<8x512xf32>, i32 -> vector<8x512xf32>
    %c7_115 = arith.constant 7 : index
    %c0_116 = arith.constant 0 : index
    %137 = vector.load %arg2[%c7_115, %c0_116] : memref<9x512xf32, #tpu.memory_space<vmem>>, vector<1x512xf32>
    %138 = vector.broadcast %137 : vector<1x512xf32> to vector<8x512xf32>
    %139 = arith.mulf %136, %138 : vector<8x512xf32>
    %c56_117 = arith.constant 56 : index
    %c0_118 = arith.constant 0 : index
    %140 = vector.load %arg6[%c56_117, %c0_118] : memref<72x512xf32, #tpu.memory_space<vmem>>, vector<8x512xf32>
    tpu.vector_store %arg6[%c56_117, %c0_118], %139 {strides = array<i32>} : memref<72x512xf32, #tpu.memory_space<vmem>>, vector<8x512xf32>,
    %c495_i32_119 = arith.constant 495 : i32
    %141 = tpu.dynamic_rotate %104 by %c495_i32_119 dim 1 : vector<8x512xf32>, i32 -> vector<8x512xf32>
    %c8_120 = arith.constant 8 : index
    %c0_121 = arith.constant 0 : index
    %142 = vector.load %arg2[%c8_120, %c0_121] : memref<9x512xf32, #tpu.memory_space<vmem>>, vector<1x512xf32>
    %143 = vector.broadcast %142 : vector<1x512xf32> to vector<8x512xf32>
    %144 = arith.mulf %141, %143 : vector<8x512xf32>
    %c64_122 = arith.constant 64 : index
    %c0_123 = arith.constant 0 : index
    %145 = vector.load %arg6[%c64_122, %c0_123] : memref<72x512xf32, #tpu.memory_space<vmem>>, vector<8x512xf32>
    tpu.vector_store %arg6[%c64_122, %c0_123], %144 {strides = array<i32>} : memref<72x512xf32, #tpu.memory_space<vmem>>, vector<8x512xf32>,
    %c0_124 = arith.constant 0 : index
    %c0_125 = arith.constant 0 : index
    %146 = vector.load %arg6[%c0_124, %c0_125] : memref<72x512xf32, #tpu.memory_space<vmem>>, vector<72x512xf32>
    %147 = arith.truncf %146 : vector<72x512xf32> to vector<72x512xbf16>
    %c2_126 = arith.constant 2 : index
    %c0_127 = arith.constant 0 : index
    %c0_128 = arith.constant 0 : index
    %148 = vector.load %arg3[%c2_126, %c0_127, %c0_128] : memref<4x8x72xbf16, #tpu.memory_space<vmem>>, vector<1x8x72xbf16>
    %149 = vector.shape_cast %148 : vector<1x8x72xbf16> to vector<8x72xbf16>
    %cst_129 = arith.constant dense<0.000000e+00> : vector<8x512xf32>
    %150 = tpu.matmul %149, %147, %cst_129 {dimension_numbers = #tpu.dot_dimension_numbers<[1], [0], [0], [1], [0, 0, 1, 1], [], []>} : vector<8x72xbf16>, vector<72x512xbf16>, vector<8x512xf32> -> vector<8x512xf32>
    %c2_130 = arith.constant 2 : index
    %c0_131 = arith.constant 0 : index
    %c0_132 = arith.constant 0 : index
    %151 = vector.load %arg4[%c2_130, %c0_131, %c0_132] : memref<4x8x1xf32, #tpu.memory_space<vmem>>, vector<1x8x1xf32>
    %152 = vector.shape_cast %151 : vector<1x8x1xf32> to vector<8x1xf32>
    %153 = vector.broadcast %152 : vector<8x1xf32> to vector<8x512xf32>
    %154 = arith.addf %150, %153 : vector<8x512xf32>
    %cst_133 = arith.constant 0.000000e+00 : f32
    %155 = vector.broadcast %cst_133 : f32 to vector<8x512xf32>
    %156 = arith.maximumf %154, %155 : vector<8x512xf32>
    %c17_i32_134 = arith.constant 17 : i32
    %157 = tpu.dynamic_rotate %156 by %c17_i32_134 dim 1 : vector<8x512xf32>, i32 -> vector<8x512xf32>
    %c0_135 = arith.constant 0 : index
    %c0_136 = arith.constant 0 : index
    %158 = vector.load %arg2[%c0_135, %c0_136] : memref<9x512xf32, #tpu.memory_space<vmem>>, vector<1x512xf32>
    %159 = vector.broadcast %158 : vector<1x512xf32> to vector<8x512xf32>
    %160 = arith.mulf %157, %159 : vector<8x512xf32>
    %c0_137 = arith.constant 0 : index
    %c0_138 = arith.constant 0 : index
    %161 = vector.load %arg6[%c0_137, %c0_138] : memref<72x512xf32, #tpu.memory_space<vmem>>, vector<8x512xf32>
    tpu.vector_store %arg6[%c0_137, %c0_138], %160 {strides = array<i32>} : memref<72x512xf32, #tpu.memory_space<vmem>>, vector<8x512xf32>,
    %c16_i32_139 = arith.constant 16 : i32
    %162 = tpu.dynamic_rotate %156 by %c16_i32_139 dim 1 : vector<8x512xf32>, i32 -> vector<8x512xf32>
    %c1_140 = arith.constant 1 : index
    %c0_141 = arith.constant 0 : index
    %163 = vector.load %arg2[%c1_140, %c0_141] : memref<9x512xf32, #tpu.memory_space<vmem>>, vector<1x512xf32>
    %164 = vector.broadcast %163 : vector<1x512xf32> to vector<8x512xf32>
    %165 = arith.mulf %162, %164 : vector<8x512xf32>
    %c8_142 = arith.constant 8 : index
    %c0_143 = arith.constant 0 : index
    %166 = vector.load %arg6[%c8_142, %c0_143] : memref<72x512xf32, #tpu.memory_space<vmem>>, vector<8x512xf32>
    tpu.vector_store %arg6[%c8_142, %c0_143], %165 {strides = array<i32>} : memref<72x512xf32, #tpu.memory_space<vmem>>, vector<8x512xf32>,
    %c15_i32_144 = arith.constant 15 : i32
    %167 = tpu.dynamic_rotate %156 by %c15_i32_144 dim 1 : vector<8x512xf32>, i32 -> vector<8x512xf32>
    %c2_145 = arith.constant 2 : index
    %c0_146 = arith.constant 0 : index
    %168 = vector.load %arg2[%c2_145, %c0_146] : memref<9x512xf32, #tpu.memory_space<vmem>>, vector<1x512xf32>
    %169 = vector.broadcast %168 : vector<1x512xf32> to vector<8x512xf32>
    %170 = arith.mulf %167, %169 : vector<8x512xf32>
    %c16_147 = arith.constant 16 : index
    %c0_148 = arith.constant 0 : index
    %171 = vector.load %arg6[%c16_147, %c0_148] : memref<72x512xf32, #tpu.memory_space<vmem>>, vector<8x512xf32>
    tpu.vector_store %arg6[%c16_147, %c0_148], %170 {strides = array<i32>} : memref<72x512xf32, #tpu.memory_space<vmem>>, vector<8x512xf32>,
    %c1_i32_149 = arith.constant 1 : i32
    %172 = tpu.dynamic_rotate %156 by %c1_i32_149 dim 1 : vector<8x512xf32>, i32 -> vector<8x512xf32>
    %c3_150 = arith.constant 3 : index
    %c0_151 = arith.constant 0 : index
    %173 = vector.load %arg2[%c3_150, %c0_151] : memref<9x512xf32, #tpu.memory_space<vmem>>, vector<1x512xf32>
    %174 = vector.broadcast %173 : vector<1x512xf32> to vector<8x512xf32>
    %175 = arith.mulf %172, %174 : vector<8x512xf32>
    %c24_152 = arith.constant 24 : index
    %c0_153 = arith.constant 0 : index
    %176 = vector.load %arg6[%c24_152, %c0_153] : memref<72x512xf32, #tpu.memory_space<vmem>>, vector<8x512xf32>
    tpu.vector_store %arg6[%c24_152, %c0_153], %175 {strides = array<i32>} : memref<72x512xf32, #tpu.memory_space<vmem>>, vector<8x512xf32>,
    %c32_154 = arith.constant 32 : index
    %c0_155 = arith.constant 0 : index
    %177 = vector.load %arg6[%c32_154, %c0_155] : memref<72x512xf32, #tpu.memory_space<vmem>>, vector<8x512xf32>
    tpu.vector_store %arg6[%c32_154, %c0_155], %156 {strides = array<i32>} : memref<72x512xf32, #tpu.memory_space<vmem>>, vector<8x512xf32>,
    %c511_i32_156 = arith.constant 511 : i32
    %178 = tpu.dynamic_rotate %156 by %c511_i32_156 dim 1 : vector<8x512xf32>, i32 -> vector<8x512xf32>
    %c5_157 = arith.constant 5 : index
    %c0_158 = arith.constant 0 : index
    %179 = vector.load %arg2[%c5_157, %c0_158] : memref<9x512xf32, #tpu.memory_space<vmem>>, vector<1x512xf32>
    %180 = vector.broadcast %179 : vector<1x512xf32> to vector<8x512xf32>
    %181 = arith.mulf %178, %180 : vector<8x512xf32>
    %c40_159 = arith.constant 40 : index
    %c0_160 = arith.constant 0 : index
    %182 = vector.load %arg6[%c40_159, %c0_160] : memref<72x512xf32, #tpu.memory_space<vmem>>, vector<8x512xf32>
    tpu.vector_store %arg6[%c40_159, %c0_160], %181 {strides = array<i32>} : memref<72x512xf32, #tpu.memory_space<vmem>>, vector<8x512xf32>,
    %c497_i32_161 = arith.constant 497 : i32
    %183 = tpu.dynamic_rotate %156 by %c497_i32_161 dim 1 : vector<8x512xf32>, i32 -> vector<8x512xf32>
    %c6_162 = arith.constant 6 : index
    %c0_163 = arith.constant 0 : index
    %184 = vector.load %arg2[%c6_162, %c0_163] : memref<9x512xf32, #tpu.memory_space<vmem>>, vector<1x512xf32>
    %185 = vector.broadcast %184 : vector<1x512xf32> to vector<8x512xf32>
    %186 = arith.mulf %183, %185 : vector<8x512xf32>
    %c48_164 = arith.constant 48 : index
    %c0_165 = arith.constant 0 : index
    %187 = vector.load %arg6[%c48_164, %c0_165] : memref<72x512xf32, #tpu.memory_space<vmem>>, vector<8x512xf32>
    tpu.vector_store %arg6[%c48_164, %c0_165], %186 {strides = array<i32>} : memref<72x512xf32, #tpu.memory_space<vmem>>, vector<8x512xf32>,
    %c496_i32_166 = arith.constant 496 : i32
    %188 = tpu.dynamic_rotate %156 by %c496_i32_166 dim 1 : vector<8x512xf32>, i32 -> vector<8x512xf32>
    %c7_167 = arith.constant 7 : index
    %c0_168 = arith.constant 0 : index
    %189 = vector.load %arg2[%c7_167, %c0_168] : memref<9x512xf32, #tpu.memory_space<vmem>>, vector<1x512xf32>
    %190 = vector.broadcast %189 : vector<1x512xf32> to vector<8x512xf32>
    %191 = arith.mulf %188, %190 : vector<8x512xf32>
    %c56_169 = arith.constant 56 : index
    %c0_170 = arith.constant 0 : index
    %192 = vector.load %arg6[%c56_169, %c0_170] : memref<72x512xf32, #tpu.memory_space<vmem>>, vector<8x512xf32>
    tpu.vector_store %arg6[%c56_169, %c0_170], %191 {strides = array<i32>} : memref<72x512xf32, #tpu.memory_space<vmem>>, vector<8x512xf32>,
    %c495_i32_171 = arith.constant 495 : i32
    %193 = tpu.dynamic_rotate %156 by %c495_i32_171 dim 1 : vector<8x512xf32>, i32 -> vector<8x512xf32>
    %c8_172 = arith.constant 8 : index
    %c0_173 = arith.constant 0 : index
    %194 = vector.load %arg2[%c8_172, %c0_173] : memref<9x512xf32, #tpu.memory_space<vmem>>, vector<1x512xf32>
    %195 = vector.broadcast %194 : vector<1x512xf32> to vector<8x512xf32>
    %196 = arith.mulf %193, %195 : vector<8x512xf32>
    %c64_174 = arith.constant 64 : index
    %c0_175 = arith.constant 0 : index
    %197 = vector.load %arg6[%c64_174, %c0_175] : memref<72x512xf32, #tpu.memory_space<vmem>>, vector<8x512xf32>
    tpu.vector_store %arg6[%c64_174, %c0_175], %196 {strides = array<i32>} : memref<72x512xf32, #tpu.memory_space<vmem>>, vector<8x512xf32>,
    %c0_176 = arith.constant 0 : index
    %c0_177 = arith.constant 0 : index
    %198 = vector.load %arg6[%c0_176, %c0_177] : memref<72x512xf32, #tpu.memory_space<vmem>>, vector<72x512xf32>
    %199 = arith.truncf %198 : vector<72x512xf32> to vector<72x512xbf16>
    %c3_178 = arith.constant 3 : index
    %c0_179 = arith.constant 0 : index
    %c0_180 = arith.constant 0 : index
    %200 = vector.load %arg3[%c3_178, %c0_179, %c0_180] : memref<4x8x72xbf16, #tpu.memory_space<vmem>>, vector<1x8x72xbf16>
    %201 = vector.shape_cast %200 : vector<1x8x72xbf16> to vector<8x72xbf16>
    %cst_181 = arith.constant dense<0.000000e+00> : vector<8x512xf32>
    %202 = tpu.matmul %201, %199, %cst_181 {dimension_numbers = #tpu.dot_dimension_numbers<[1], [0], [0], [1], [0, 0, 1, 1], [], []>} : vector<8x72xbf16>, vector<72x512xbf16>, vector<8x512xf32> -> vector<8x512xf32>
    %c3_182 = arith.constant 3 : index
    %c0_183 = arith.constant 0 : index
    %c0_184 = arith.constant 0 : index
    %203 = vector.load %arg4[%c3_182, %c0_183, %c0_184] : memref<4x8x1xf32, #tpu.memory_space<vmem>>, vector<1x8x1xf32>
    %204 = vector.shape_cast %203 : vector<1x8x1xf32> to vector<8x1xf32>
    %205 = vector.broadcast %204 : vector<8x1xf32> to vector<8x512xf32>
    %206 = arith.addf %202, %205 : vector<8x512xf32>
    %cst_185 = arith.constant 0.000000e+00 : f32
    %207 = vector.broadcast %cst_185 : f32 to vector<8x512xf32>
    %208 = arith.maximumf %206, %207 : vector<8x512xf32>
    %c0_186 = arith.constant 0 : index
    %c0_187 = arith.constant 0 : index
    %209 = vector.load %arg5[%c0_186, %c0_187] : memref<8x512xf32, #tpu.memory_space<vmem>>, vector<8x512xf32>
    tpu.vector_store %arg5[%c0_186, %c0_187], %208 {strides = array<i32>} : memref<8x512xf32, #tpu.memory_space<vmem>>, vector<8x512xf32>,
    return
  }
  func.func @transform_0(%arg0: i32) -> (i32, i32) {
    %c0_i32 = arith.constant 0 : i32
    %c0_i32_0 = arith.constant 0 : i32
    return %c0_i32, %arg0 : i32, i32
  }
  func.func @transform_1(%arg0: i32) -> (i32, i32) {
    %c0_i32 = arith.constant 0 : i32
    %c0_i32_0 = arith.constant 0 : i32
    %c0_i32_1 = arith.constant 0 : i32
    return %c0_i32, %c0_i32_0 : i32, i32
  }
  func.func @transform_2(%arg0: i32) -> (i32, i32, i32) {
    %c0_i32 = arith.constant 0 : i32
    %c0_i32_0 = arith.constant 0 : i32
    %c0_i32_1 = arith.constant 0 : i32
    %c0_i32_2 = arith.constant 0 : i32
    return %c0_i32, %c0_i32_0, %c0_i32_1 : i32, i32, i32
  }
  func.func @transform_3(%arg0: i32) -> (i32, i32, i32) {
    %c0_i32 = arith.constant 0 : i32
    %c0_i32_0 = arith.constant 0 : i32
    %c0_i32_1 = arith.constant 0 : i32
    %c0_i32_2 = arith.constant 0 : i32
    return %c0_i32, %c0_i32_0, %c0_i32_1 : i32, i32, i32
  }
  func.func @transform_4(%arg0: i32) -> (i32, i32) {
    %c0_i32 = arith.constant 0 : i32
    %c0_i32_0 = arith.constant 0 : i32
    return %c0_i32, %arg0 : i32, i32
  }
}

</mosaic_0001>

<llo_original>
// kernel: fusion0_forward.1
$region0: #{fusion0_forward.1}
  #allocation0 [shape = 'u32[]', space=smem, size = 0x4, offset = 0x4, fixed_abs, tag = 'smem constant byte address 0x4 - core index']
  #allocation1 [shape = 'u32[144,128]{1,0:T(1,128)}', space=vmem, size = 0x12000, scoped, tag = 'internal scratch']
  #allocation2 [shape = 'f32[72,512]{1,0:T(8,128)}', space=vmem, size = 0x24000, scoped, tag = 'scratch operand']
  %s0 = inlined_call_operand.vmem [shape: f32[8,512], index: 0, kind: input, shape index: {}]
  %s1 = inlined_call_operand.vmem [shape: f32[9,512], index: 1, kind: input, shape index: {}]
  %s2 = inlined_call_operand.vmem [shape: bf16[4,8,72], index: 2, kind: input, shape index: {}]
  %s3 = inlined_call_operand.vmem [shape: f32[4,8,1], index: 3, kind: input, shape index: {}]
  %s4 = inlined_call_operand.vmem [shape: f32[8,512], index: 4, kind: output, shape index: {}]
  %s5 = sld [smem:[#allocation0]]
  $region26: #{fusion0_forward.1} parent=0
    _
  %s7 = ssub.s32 1, %s5
  %s8 = scalar_select 0, %s7, %s5
  // Predicated region
  $region2: #{fusion0_forward.1} parent=0 // pred_check
    _
  $region3: #{fusion0_forward.1} parent=0 // pred_check_branch
    %10 = sbr.rel (0) target = $region5
  $region4: #{fusion0_forward.1} parent=0 // pred_region
    _
  $region5: #{fusion0_forward.1} parent=0 // pred_fallthru
    _
  // Predicated region
  $region6: #{fusion0_forward.1} parent=0 // pred_check
    _
  $region7: #{fusion0_forward.1} parent=0 // pred_check_branch
    %12 = sbr.rel (0) target = $region9
  $region8: #{fusion0_forward.1} parent=0 // pred_region
    _
  $region9: #{fusion0_forward.1} parent=0 // pred_fallthru
    _
  // Predicated region
  $region10: #{fusion0_forward.1} parent=0 // pred_check
    _
  $region11: #{fusion0_forward.1} parent=0 // pred_check_branch
    %14 = sbr.rel (0) target = $region13
  $region12: #{fusion0_forward.1} parent=0 // pred_region
    _
  $region13: #{fusion0_forward.1} parent=0 // pred_fallthru
    _
  // Predicated region
  $region14: #{fusion0_forward.1} parent=0 // pred_check
    _
  $region15: #{fusion0_forward.1} parent=0 // pred_check_branch
    %16 = sbr.rel (0) target = $region17
  $region16: #{fusion0_forward.1} parent=0 // pred_region
    _
  $region17: #{fusion0_forward.1} parent=0 // pred_fallthru
    _
  %v18 = vld [vmem:[%s0] sm:$0xff]
  %v19 = vld [vmem:[%s0 + $0x8] sm:$0xff]
  %v20 = vld [vmem:[%s0 + $0x10] sm:$0xff]
  %v21 = vld [vmem:[%s0 + $0x18] sm:$0xff]
  %22 = vrot.lane.b32.xlu0 %v18, 17
  %v23 = vpop.permute.xlu0 %22
  %24 = vrot.lane.b32.xlu0 %v19, 17
  %v25 = vpop.permute.xlu0 %24
  %26 = vrot.lane.b32.xlu0 %v20, 17
  %v27 = vpop.permute.xlu0 %26
  %28 = vrot.lane.b32.xlu0 %v21, 17
  %v29 = vpop.permute.xlu0 %28
  %v30 = vlaneseq
  %v31 = vand.u32 %v30, 127
  %vm32 = vcmp.lt.s32.totalorder %v31, 17
  %v33 = vsel %vm32, %v27, %v29
  %v34 = vsel %vm32, %v25, %v27
  %v35 = vsel %vm32, %v23, %v25
  %v36 = vsel %vm32, %v29, %v23
  %v37 = vld [vmem:[%s1] ss:$8 sm:$0xf]
  %v39 = vlaneseq
  %v40 = vshrl.u32 %v39, 7
  %v41 = vsub.s32 0, %v40
  %v42 = vrot.slane %v37, %v41
  %v43 = vlaneseq
  %v44 = vshrl.u32 %v43, 7
  %v45 = vsub.s32 1, %v44
  %v46 = vrot.slane %v37, %v45
  %v47 = vlaneseq
  %v48 = vshrl.u32 %v47, 7
  %v49 = vsub.s32 2, %v48
  %v50 = vrot.slane %v37, %v49
  %v51 = vlaneseq
  %v52 = vshrl.u32 %v51, 7
  %v53 = vsub.s32 3, %v52
  %v54 = vrot.slane %v37, %v53
  %v59 = vmul.f32 %v36, %v42
  %v60 = vmul.f32 %v35, %v46
  %v61 = vmul.f32 %v34, %v50
  %v62 = vmul.f32 %v33, %v54
  %63 = vst [vmem:[#allocation2] sm:$0xff] %v59
  %64 = vst [vmem:[#allocation2 + $0x8] sm:$0xff] %v60
  %65 = vst [vmem:[#allocation2 + $0x10] sm:$0xff] %v61
  %66 = vst [vmem:[#allocation2 + $0x18] sm:$0xff] %v62
  %67 = vrot.lane.b32.xlu0 %v18, 16
  %v68 = vpop.permute.xlu0 %67
  %69 = vrot.lane.b32.xlu0 %v19, 16
  %v70 = vpop.permute.xlu0 %69
  %71 = vrot.lane.b32.xlu0 %v20, 16
  %v72 = vpop.permute.xlu0 %71
  %73 = vrot.lane.b32.xlu0 %v21, 16
  %v74 = vpop.permute.xlu0 %73
  %vm75 = vcmp.lt.s32.totalorder %v31, 16
  %v76 = vsel %vm75, %v72, %v74
  %v77 = vsel %vm75, %v70, %v72
  %v78 = vsel %vm75, %v68, %v70
  %v79 = vsel %vm75, %v74, %v68
  %s80 = scalar_lea.vmem %s1, 1
  %v81 = vld [vmem:[%s80] ss:$8 sm:$0xf]
  %v83 = vlaneseq
  %v84 = vshrl.u32 %v83, 7
  %v85 = vsub.s32 0, %v84
  %v86 = vrot.slane %v81, %v85
  %v87 = vlaneseq
  %v88 = vshrl.u32 %v87, 7
  %v89 = vsub.s32 1, %v88
  %v90 = vrot.slane %v81, %v89
  %v91 = vlaneseq
  %v92 = vshrl.u32 %v91, 7
  %v93 = vsub.s32 2, %v92
  %v94 = vrot.slane %v81, %v93
  %v95 = vlaneseq
  %v96 = vshrl.u32 %v95, 7
  %v97 = vsub.s32 3, %v96
  %v98 = vrot.slane %v81, %v97
  %v103 = vmul.f32 %v79, %v86
  %v104 = vmul.f32 %v78, %v90
  %v105 = vmul.f32 %v77, %v94
  %v106 = vmul.f32 %v76, %v98
  %107 = vst [vmem:[#allocation2 + $0x20] sm:$0xff] %v103
  %108 = vst [vmem:[#allocation2 + $0x28] sm:$0xff] %v104
  %109 = vst [vmem:[#allocation2 + $0x30] sm:$0xff] %v105
  %110 = vst [vmem:[#allocation2 + $0x38] sm:$0xff] %v106
  %111 = vrot.lane.b32.xlu0 %v18, 15
  %v112 = vpop.permute.xlu0 %111
  %113 = vrot.lane.b32.xlu0 %v19, 15
  %v114 = vpop.permute.xlu0 %113
  %115 = vrot.lane.b32.xlu0 %v20, 15
  %v116 = vpop.permute.xlu0 %115
  %117 = vrot.lane.b32.xlu0 %v21, 15
  %v118 = vpop.permute.xlu0 %117
  %vm119 = vcmp.lt.s32.totalorder %v31, 15
  %v120 = vsel %vm119, %v116, %v118
  %v121 = vsel %vm119, %v114, %v116
  %v122 = vsel %vm119, %v112, %v114
  %v123 = vsel %vm119, %v118, %v112
  %s124 = scalar_lea.vmem %s1, 2
  %v125 = vld [vmem:[%s124] ss:$8 sm:$0xf]
  %v127 = vlaneseq
  %v128 = vshrl.u32 %v127, 7
  %v129 = vsub.s32 0, %v128
  %v130 = vrot.slane %v125, %v129
  %v131 = vlaneseq
  %v132 = vshrl.u32 %v131, 7
  %v133 = vsub.s32 1, %v132
  %v134 = vrot.slane %v125, %v133
  %v135 = vlaneseq
  %v136 = vshrl.u32 %v135, 7
  %v137 = vsub.s32 2, %v136
  %v138 = vrot.slane %v125, %v137
  %v139 = vlaneseq
  %v140 = vshrl.u32 %v139, 7
  %v141 = vsub.s32 3, %v140
  %v142 = vrot.slane %v125, %v141
  %v147 = vmul.f32 %v123, %v130
  %v148 = vmul.f32 %v122, %v134
  %v149 = vmul.f32 %v121, %v138
  %v150 = vmul.f32 %v120, %v142
  %151 = vst [vmem:[#allocation2 + $0x40] sm:$0xff] %v147
  %152 = vst [vmem:[#allocation2 + $0x48] sm:$0xff] %v148
  %153 = vst [vmem:[#allocation2 + $0x50] sm:$0xff] %v149
  %154 = vst [vmem:[#allocation2 + $0x58] sm:$0xff] %v150
  %155 = vrot.lane.b32.xlu0 %v18, 1
  %v156 = vpop.permute.xlu0 %155
  %157 = vrot.lane.b32.xlu0 %v19, 1
  %v158 = vpop.permute.xlu0 %157
  %159 = vrot.lane.b32.xlu0 %v20, 1
  %v160 = vpop.permute.xlu0 %159
  %161 = vrot.lane.b32.xlu0 %v21, 1
  %v162 = vpop.permute.xlu0 %161
  %vm163 = vcmp.lt.s32.totalorder %v31, 1
  %v164 = vsel %vm163, %v160, %v162
  %v165 = vsel %vm163, %v158, %v160
  %v166 = vsel %vm163, %v156, %v158
  %v167 = vsel %vm163, %v162, %v156
  %s168 = scalar_lea.vmem %s1, 3
  %v169 = vld [vmem:[%s168] ss:$8 sm:$0xf]
  %v171 = vlaneseq
  %v172 = vshrl.u32 %v171, 7
  %v173 = vsub.s32 0, %v172
  %v174 = vrot.slane %v169, %v173
  %v175 = vlaneseq
  %v176 = vshrl.u32 %v175, 7
  %v177 = vsub.s32 1, %v176
  %v178 = vrot.slane %v169, %v177
  %v179 = vlaneseq
  %v180 = vshrl.u32 %v179, 7
  %v181 = vsub.s32 2, %v180
  %v182 = vrot.slane %v169, %v181
  %v183 = vlaneseq
  %v184 = vshrl.u32 %v183, 7
  %v185 = vsub.s32 3, %v184
  %v186 = vrot.slane %v169, %v185
  %v191 = vmul.f32 %v167, %v174
  %v192 = vmul.f32 %v166, %v178
  %v193 = vmul.f32 %v165, %v182
  %v194 = vmul.f32 %v164, %v186
  %195 = vst [vmem:[#allocation2 + $0x60] sm:$0xff] %v191
  %196 = vst [vmem:[#allocation2 + $0x68] sm:$0xff] %v192
  %197 = vst [vmem:[#allocation2 + $0x70] sm:$0xff] %v193
  %198 = vst [vmem:[#allocation2 + $0x78] sm:$0xff] %v194
  %199 = vst [vmem:[#allocation2 + $0x80] sm:$0xff] %v18
  %200 = vst [vmem:[#allocation2 + $0x88] sm:$0xff] %v19
  %201 = vst [vmem:[#allocation2 + $0x90] sm:$0xff] %v20
  %202 = vst [vmem:[#allocation2 + $0x98] sm:$0xff] %v21
  %203 = vrot.lane.b32.xlu0 %v18, 127
  %v204 = vpop.permute.xlu0 %203
  %205 = vrot.lane.b32.xlu0 %v19, 127
  %v206 = vpop.permute.xlu0 %205
  %207 = vrot.lane.b32.xlu0 %v20, 127
  %v208 = vpop.permute.xlu0 %207
  %209 = vrot.lane.b32.xlu0 %v21, 127
  %v210 = vpop.permute.xlu0 %209
  %vm211 = vcmp.lt.s32.totalorder %v31, 127
  %v212 = vsel %vm211, %v208, %v210
  %v213 = vsel %vm211, %v206, %v208
  %v214 = vsel %vm211, %v204, %v206
  %v215 = vsel %vm211, %v210, %v204
  %s216 = scalar_lea.vmem %s1, 5
  %v217 = vld [vmem:[%s216] ss:$8 sm:$0xf]
  %v219 = vlaneseq
  %v220 = vshrl.u32 %v219, 7
  %v221 = vsub.s32 0, %v220
  %v222 = vrot.slane %v217, %v221
  %v223 = vlaneseq
  %v224 = vshrl.u32 %v223, 7
  %v225 = vsub.s32 1, %v224
  %v226 = vrot.slane %v217, %v225
  %v227 = vlaneseq
  %v228 = vshrl.u32 %v227, 7
  %v229 = vsub.s32 2, %v228
  %v230 = vrot.slane %v217, %v229
  %v231 = vlaneseq
  %v232 = vshrl.u32 %v231, 7
  %v233 = vsub.s32 3, %v232
  %v234 = vrot.slane %v217, %v233
  %v239 = vmul.f32 %v214, %v222
  %v240 = vmul.f32 %v213, %v226
  %v241 = vmul.f32 %v212, %v230
  %v242 = vmul.f32 %v215, %v234
  %243 = vst [vmem:[#allocation2 + $0xa0] sm:$0xff] %v239
  %244 = vst [vmem:[#allocation2 + $0xa8] sm:$0xff] %v240
  %245 = vst [vmem:[#allocation2 + $0xb0] sm:$0xff] %v241
  %246 = vst [vmem:[#allocation2 + $0xb8] sm:$0xff] %v242
  %247 = vrot.lane.b32.xlu0 %v18, 113
  %v248 = vpop.permute.xlu0 %247
  %249 = vrot.lane.b32.xlu0 %v19, 113
  %v250 = vpop.permute.xlu0 %249
  %251 = vrot.lane.b32.xlu0 %v20, 113
  %v252 = vpop.permute.xlu0 %251
  %253 = vrot.lane.b32.xlu0 %v21, 113
  %v254 = vpop.permute.xlu0 %253
  %vm255 = vcmp.lt.s32.totalorder %v31, 113
  %v256 = vsel %vm255, %v252, %v254
  %v257 = vsel %vm255, %v250, %v252
  %v258 = vsel %vm255, %v248, %v250
  %v259 = vsel %vm255, %v254, %v248
  %s260 = scalar_lea.vmem %s1, 6
  %v261 = vld [vmem:[%s260] ss:$8 sm:$0xf]
  %v263 = vlaneseq
  %v264 = vshrl.u32 %v263, 7
  %v265 = vsub.s32 0, %v264
  %v266 = vrot.slane %v261, %v265
  %v267 = vlaneseq
  %v268 = vshrl.u32 %v267, 7
  %v269 = vsub.s32 1, %v268
  %v270 = vrot.slane %v261, %v269
  %v271 = vlaneseq
  %v272 = vshrl.u32 %v271, 7
  %v273 = vsub.s32 2, %v272
  %v274 = vrot.slane %v261, %v273
  %v275 = vlaneseq
  %v276 = vshrl.u32 %v275, 7
  %v277 = vsub.s32 3, %v276
  %v278 = vrot.slane %v261, %v277
  %v283 = vmul.f32 %v258, %v266
  %v284 = vmul.f32 %v257, %v270
  %v285 = vmul.f32 %v256, %v274
  %v286 = vmul.f32 %v259, %v278
  %287 = vst [vmem:[#allocation2 + $0xc0] sm:$0xff] %v283
  %288 = vst [vmem:[#allocation2 + $0xc8] sm:$0xff] %v284
  %289 = vst [vmem:[#allocation2 + $0xd0] sm:$0xff] %v285
  %290 = vst [vmem:[#allocation2 + $0xd8] sm:$0xff] %v286
  %291 = vrot.lane.b32.xlu0 %v18, 112
  %v292 = vpop.permute.xlu0 %291
  %293 = vrot.lane.b32.xlu0 %v19, 112
  %v294 = vpop.permute.xlu0 %293
  %295 = vrot.lane.b32.xlu0 %v20, 112
  %v296 = vpop.permute.xlu0 %295
  %297 = vrot.lane.b32.xlu0 %v21, 112
  %v298 = vpop.permute.xlu0 %297
  %vm299 = vcmp.lt.s32.totalorder %v31, 112
  %v300 = vsel %vm299, %v296, %v298
  %v301 = vsel %vm299, %v294, %v296
  %v302 = vsel %vm299, %v292, %v294
  %v303 = vsel %vm299, %v298, %v292
  %s304 = scalar_lea.vmem %s1, 7
  %v305 = vld [vmem:[%s304] ss:$8 sm:$0xf]
  %v307 = vlaneseq
  %v308 = vshrl.u32 %v307, 7
  %v309 = vsub.s32 0, %v308
  %v310 = vrot.slane %v305, %v309
  %v311 = vlaneseq
  %v312 = vshrl.u32 %v311, 7
  %v313 = vsub.s32 1, %v312
  %v314 = vrot.slane %v305, %v313
  %v315 = vlaneseq
  %v316 = vshrl.u32 %v315, 7
  %v317 = vsub.s32 2, %v316
  %v318 = vrot.slane %v305, %v317
  %v319 = vlaneseq
  %v320 = vshrl.u32 %v319, 7
  %v321 = vsub.s32 3, %v320
  %v322 = vrot.slane %v305, %v321
  %v327 = vmul.f32 %v302, %v310
  %v328 = vmul.f32 %v301, %v314
  %v329 = vmul.f32 %v300, %v318
  %v330 = vmul.f32 %v303, %v322
  %331 = vst [vmem:[#allocation2 + $0xe0] sm:$0xff] %v327
  %332 = vst [vmem:[#allocation2 + $0xe8] sm:$0xff] %v328
  %333 = vst [vmem:[#allocation2 + $0xf0] sm:$0xff] %v329
  %334 = vst [vmem:[#allocation2 + $0xf8] sm:$0xff] %v330
  %335 = vrot.lane.b32.xlu0 %v18, 111
  %v336 = vpop.permute.xlu0 %335
  %337 = vrot.lane.b32.xlu0 %v19, 111
  %v338 = vpop.permute.xlu0 %337
  %339 = vrot.lane.b32.xlu0 %v20, 111
  %v340 = vpop.permute.xlu0 %339
  %341 = vrot.lane.b32.xlu0 %v21, 111
  %v342 = vpop.permute.xlu0 %341
  %vm343 = vcmp.lt.s32.totalorder %v31, 111
  %v344 = vsel %vm343, %v340, %v342
  %v345 = vsel %vm343, %v338, %v340
  %v346 = vsel %vm343, %v336, %v338
  %v347 = vsel %vm343, %v342, %v336
  %s348 = scalar_lea.vmem %s1, 32
  %v349 = vld [vmem:[%s348] ss:$8 sm:$0xf]
  %v351 = vlaneseq
  %v352 = vshrl.u32 %v351, 7
  %v353 = vsub.s32 0, %v352
  %v354 = vrot.slane %v349, %v353
  %v355 = vlaneseq
  %v356 = vshrl.u32 %v355, 7
  %v357 = vsub.s32 1, %v356
  %v358 = vrot.slane %v349, %v357
  %v359 = vlaneseq
  %v360 = vshrl.u32 %v359, 7
  %v361 = vsub.s32 2, %v360
  %v362 = vrot.slane %v349, %v361
  %v363 = vlaneseq
  %v364 = vshrl.u32 %v363, 7
  %v365 = vsub.s32 3, %v364
  %v366 = vrot.slane %v349, %v365
  %v371 = vmul.f32 %v346, %v354
  %v372 = vmul.f32 %v345, %v358
  %v373 = vmul.f32 %v344, %v362
  %v374 = vmul.f32 %v347, %v366
  %375 = vst [vmem:[#allocation2 + $0x100] sm:$0xff] %v371
  %376 = vst [vmem:[#allocation2 + $0x108] sm:$0xff] %v372
  %377 = vst [vmem:[#allocation2 + $0x110] sm:$0xff] %v373
  %378 = vst [vmem:[#allocation2 + $0x118] sm:$0xff] %v374
  %v379 = vld [vmem:[#allocation2] sm:$0xff]
  %v380 = vld [vmem:[#allocation2 + $0x8] sm:$0xff]
  %v381 = vld [vmem:[#allocation2 + $0x10] sm:$0xff]
  %v382 = vld [vmem:[#allocation2 + $0x18] sm:$0xff]
  %v383 = vld [vmem:[#allocation2 + $0x20] sm:$0xff]
  %v384 = vld [vmem:[#allocation2 + $0x28] sm:$0xff]
  %v385 = vld [vmem:[#allocation2 + $0x30] sm:$0xff]
  %v386 = vld [vmem:[#allocation2 + $0x38] sm:$0xff]
  %v387 = vld [vmem:[#allocation2 + $0x40] sm:$0xff]
  %v388 = vld [vmem:[#allocation2 + $0x48] sm:$0xff]
  %v389 = vld [vmem:[#allocation2 + $0x50] sm:$0xff]
  %v390 = vld [vmem:[#allocation2 + $0x58] sm:$0xff]
  %v391 = vld [vmem:[#allocation2 + $0x60] sm:$0xff]
  %v392 = vld [vmem:[#allocation2 + $0x68] sm:$0xff]
  %v393 = vld [vmem:[#allocation2 + $0x70] sm:$0xff]
  %v394 = vld [vmem:[#allocation2 + $0x78] sm:$0xff]
  %v395 = vld [vmem:[#allocation2 + $0x80] sm:$0xff]
  %v396 = vld [vmem:[#allocation2 + $0x88] sm:$0xff]
  %v397 = vld [vmem:[#allocation2 + $0x90] sm:$0xff]
  %v398 = vld [vmem:[#allocation2 + $0x98] sm:$0xff]
  %v399 = vld [vmem:[#allocation2 + $0xa0] sm:$0xff]
  %v400 = vld [vmem:[#allocation2 + $0xa8] sm:$0xff]
  %v401 = vld [vmem:[#allocation2 + $0xb0] sm:$0xff]
  %v402 = vld [vmem:[#allocation2 + $0xb8] sm:$0xff]
  %v403 = vld [vmem:[#allocation2 + $0xc0] sm:$0xff]
  %v404 = vld [vmem:[#allocation2 + $0xc8] sm:$0xff]
  %v405 = vld [vmem:[#allocation2 + $0xd0] sm:$0xff]
  %v406 = vld [vmem:[#allocation2 + $0xd8] sm:$0xff]
  %v407 = vld [vmem:[#allocation2 + $0xe0] sm:$0xff]
  %v408 = vld [vmem:[#allocation2 + $0xe8] sm:$0xff]
  %v409 = vld [vmem:[#allocation2 + $0xf0] sm:$0xff]
  %v410 = vld [vmem:[#allocation2 + $0xf8] sm:$0xff]
  %v411 = vld [vmem:[#allocation2 + $0x100] sm:$0xff]
  %v412 = vld [vmem:[#allocation2 + $0x108] sm:$0xff]
  %v413 = vld [vmem:[#allocation2 + $0x110] sm:$0xff]
  %v414 = vld [vmem:[#allocation2 + $0x118] sm:$0xff]
  %v415 = vpack.c.bf16 %v383, %v379
  %v416 = vpack.c.bf16 %v384, %v380
  %v417 = vpack.c.bf16 %v385, %v381
  %v418 = vpack.c.bf16 %v386, %v382
  %v419 = vpack.c.bf16 %v391, %v387
  %v420 = vpack.c.bf16 %v392, %v388
  %v421 = vpack.c.bf16 %v393, %v389
  %v422 = vpack.c.bf16 %v394, %v390
  %v423 = vpack.c.bf16 %v399, %v395
  %v424 = vpack.c.bf16 %v400, %v396
  %v425 = vpack.c.bf16 %v401, %v397
  %v426 = vpack.c.bf16 %v402, %v398
  %v427 = vpack.c.bf16 %v407, %v403
  %v428 = vpack.c.bf16 %v408, %v404
  %v429 = vpack.c.bf16 %v409, %v405
  %v430 = vpack.c.bf16 %v410, %v406
  %v431 = vpack.c.bf16 %v411, %v411
  %v432 = vpack.c.bf16 %v412, %v412
  %v433 = vpack.c.bf16 %v413, %v413
  %v434 = vpack.c.bf16 %v414, %v414
  %v435 = vld [vmem:[%s2] sm:$0xf]
  %v436 = vld [vmem:[%s3] sm:$0xff]
  %438 = vset.pattern.permute.xlu0 0
  %439 = vperm.xlu0 %438, %v436
  %v440 = vpop.permute.xlu0 %439
  %vm442 = vcmask 588800
  %v444 = vsel %vm442, %v435, 0
  %vm446 = vcmask 1043456
  %v448 = vsel %vm446, %v431, 0
  %v451 = vsel %vm446, %v432, 0
  %v454 = vsel %vm446, %v433, 0
  %v457 = vsel %vm446, %v434, 0
  %459 = vmatprep.subr.bf16.mxu0 0
  %460 = vmatpush1.bf16.msra.mxu0 0
  %461 = vmatprep.subr.bf16.mxu0 0
  %462 = vmatpush1.bf16.msra.mxu0 0
  %463 = vmatprep.subr.bf16.mxu0 0
  %464 = vmatpush1.bf16.msra.mxu0 0
  %465 = vmatprep.subr.bf16.mxu0 %v451
  %466 = vmatpush1.bf16.msra.mxu0 %v448
  %467 = vmatprep.subr.bf16.mxu0 %v428
  %468 = vmatpush1.bf16.msra.mxu0 %v427
  %469 = vmatprep.subr.bf16.mxu0 %v424
  %470 = vmatpush1.bf16.msra.mxu0 %v423
  %471 = vmatprep.subr.bf16.mxu0 %v420
  %472 = vmatpush1.bf16.msra.mxu0 %v419
  %473 = vmatprep.subr.bf16.mxu0 %v416
  %474 = vmatpush1.bf16.msra.mxu0 %v415
  %475 = vmatprep.subr.bf16.mxu0 0
  %476 = vmatpush2.bf16.msra.mxu0 0
  %477 = vmatprep.subr.bf16.mxu0 0
  %478 = vmatpush2.bf16.msra.mxu0 0
  %479 = vmatprep.subr.bf16.mxu0 0
  %480 = vmatpush2.bf16.msra.mxu0 0
  %481 = vmatprep.subr.bf16.mxu0 0
  %482 = vmatpush2.bf16.msra.mxu0 0
  %483 = vmatprep.subr.bf16.mxu0 0
  %484 = vmatpush2.bf16.msra.mxu0 0
  %485 = vmatprep.subr.bf16.mxu0 0
  %486 = vmatpush2.bf16.msra.mxu0 0
  %487 = vmatprep.subr.bf16.mxu0 0
  %488 = vmatpush2.bf16.msra.mxu0 0
  %489 = vmatprep.subr.bf16.mxu0 0
  %490 = vmatpush2.bf16.msra.mxu0 0
  %491 = vmatprep.mubr.bf16.mxu0 0
  %492 = vmatmul.mubr.bf16.gmra.mxu0 %v444
  %v493 = vpop.f32.mrf.mxu0
  %v494 = vadd.f32 %v440, %v493
  %v495 = vpop.f32.mrf.mxu0
  %v496 = vadd.f32 %v440, %v495
  %v497 = vpop.f32.mrf.mxu0
  %v498 = vpop.f32.mrf.mxu0
  %499 = vdwg.mxu0
  %500 = vmatprep.subr.bf16.mxu0 0
  %501 = vmatpush1.bf16.msra.mxu0 0
  %502 = vmatprep.subr.bf16.mxu0 0
  %503 = vmatpush1.bf16.msra.mxu0 0
  %504 = vmatprep.subr.bf16.mxu0 0
  %505 = vmatpush1.bf16.msra.mxu0 0
  %506 = vmatprep.subr.bf16.mxu0 %v457
  %507 = vmatpush1.bf16.msra.mxu0 %v454
  %508 = vmatprep.subr.bf16.mxu0 %v430
  %509 = vmatpush1.bf16.msra.mxu0 %v429
  %510 = vmatprep.subr.bf16.mxu0 %v426
  %511 = vmatpush1.bf16.msra.mxu0 %v425
  %512 = vmatprep.subr.bf16.mxu0 %v422
  %513 = vmatpush1.bf16.msra.mxu0 %v421
  %514 = vmatprep.subr.bf16.mxu0 %v418
  %515 = vmatpush1.bf16.msra.mxu0 %v417
  %516 = vmatprep.subr.bf16.mxu0 0
  %517 = vmatpush2.bf16.msra.mxu0 0
  %518 = vmatprep.subr.bf16.mxu0 0
  %519 = vmatpush2.bf16.msra.mxu0 0
  %520 = vmatprep.subr.bf16.mxu0 0
  %521 = vmatpush2.bf16.msra.mxu0 0
  %522 = vmatprep.subr.bf16.mxu0 0
  %523 = vmatpush2.bf16.msra.mxu0 0
  %524 = vmatprep.subr.bf16.mxu0 0
  %525 = vmatpush2.bf16.msra.mxu0 0
  %526 = vmatprep.subr.bf16.mxu0 0
  %527 = vmatpush2.bf16.msra.mxu0 0
  %528 = vmatprep.subr.bf16.mxu0 0
  %529 = vmatpush2.bf16.msra.mxu0 0
  %530 = vmatprep.subr.bf16.mxu0 0
  %531 = vmatpush2.bf16.msra.mxu0 0
  %532 = vmatprep.mubr.bf16.mxu0 0
  %533 = vmatmul.mubr.bf16.gmra.mxu0 %v444
  %v534 = vpop.f32.mrf.mxu0
  %v535 = vadd.f32 %v440, %v534
  %v536 = vpop.f32.mrf.mxu0
  %v537 = vadd.f32 %v440, %v536
  %v538 = vpop.f32.mrf.mxu0
  %v539 = vpop.f32.mrf.mxu0
  %540 = vdwg.mxu0
  %v541 = vmax.f32 %v494, 0.0
  %v542 = vmax.f32 %v496, 0.0
  %v543 = vmax.f32 %v535, 0.0
  %v544 = vmax.f32 %v537, 0.0
  %545 = vrot.lane.b32.xlu0 %v541, 17
  %v546 = vpop.permute.xlu0 %545
  %547 = vrot.lane.b32.xlu0 %v542, 17
  %v548 = vpop.permute.xlu0 %547
  %549 = vrot.lane.b32.xlu0 %v543, 17
  %v550 = vpop.permute.xlu0 %549
  %551 = vrot.lane.b32.xlu0 %v544, 17
  %v552 = vpop.permute.xlu0 %551
  %v553 = vsel %vm32, %v550, %v552
  %v554 = vsel %vm32, %v548, %v550
  %v555 = vsel %vm32, %v546, %v548
  %v556 = vsel %vm32, %v552, %v546
  %v557 = vld [vmem:[%s1] ss:$8 sm:$0xf]
  %v559 = vlaneseq
  %v560 = vshrl.u32 %v559, 7
  %v561 = vsub.s32 0, %v560
  %v562 = vrot.slane %v557, %v561
  %v563 = vlaneseq
  %v564 = vshrl.u32 %v563, 7
  %v565 = vsub.s32 1, %v564
  %v566 = vrot.slane %v557, %v565
  %v567 = vlaneseq
  %v568 = vshrl.u32 %v567, 7
  %v569 = vsub.s32 2, %v568
  %v570 = vrot.slane %v557, %v569
  %v571 = vlaneseq
  %v572 = vshrl.u32 %v571, 7
  %v573 = vsub.s32 3, %v572
  %v574 = vrot.slane %v557, %v573
  %v579 = vmul.f32 %v556, %v562
  %v580 = vmul.f32 %v555, %v566
  %v581 = vmul.f32 %v554, %v570
  %v582 = vmul.f32 %v553, %v574
  %583 = vst [vmem:[#allocation2] sm:$0xff] %v579
  %584 = vst [vmem:[#allocation2 + $0x8] sm:$0xff] %v580
  %585 = vst [vmem:[#allocation2 + $0x10] sm:$0xff] %v581
  %586 = vst [vmem:[#allocation2 + $0x18] sm:$0xff] %v582
  %587 = vrot.lane.b32.xlu0 %v541, 16
  %v588 = vpop.permute.xlu0 %587
  %589 = vrot.lane.b32.xlu0 %v542, 16
  %v590 = vpop.permute.xlu0 %589
  %591 = vrot.lane.b32.xlu0 %v543, 16
  %v592 = vpop.permute.xlu0 %591
  %593 = vrot.lane.b32.xlu0 %v544, 16
  %v594 = vpop.permute.xlu0 %593
  %v595 = vsel %vm75, %v592, %v594
  %v596 = vsel %vm75, %v590, %v592
  %v597 = vsel %vm75, %v588, %v590
  %v598 = vsel %vm75, %v594, %v588
  %v599 = vld [vmem:[%s80] ss:$8 sm:$0xf]
  %v601 = vlaneseq
  %v602 = vshrl.u32 %v601, 7
  %v603 = vsub.s32 0, %v602
  %v604 = vrot.slane %v599, %v603
  %v605 = vlaneseq
  %v606 = vshrl.u32 %v605, 7
  %v607 = vsub.s32 1, %v606
  %v608 = vrot.slane %v599, %v607
  %v609 = vlaneseq
  %v610 = vshrl.u32 %v609, 7
  %v611 = vsub.s32 2, %v610
  %v612 = vrot.slane %v599, %v611
  %v613 = vlaneseq
  %v614 = vshrl.u32 %v613, 7
  %v615 = vsub.s32 3, %v614
  %v616 = vrot.slane %v599, %v615
  %v621 = vmul.f32 %v598, %v604
  %v622 = vmul.f32 %v597, %v608
  %v623 = vmul.f32 %v596, %v612
  %v624 = vmul.f32 %v595, %v616
  %625 = vst [vmem:[#allocation2 + $0x20] sm:$0xff] %v621
  %626 = vst [vmem:[#allocation2 + $0x28] sm:$0xff] %v622
  %627 = vst [vmem:[#allocation2 + $0x30] sm:$0xff] %v623
  %628 = vst [vmem:[#allocation2 + $0x38] sm:$0xff] %v624
  %629 = vrot.lane.b32.xlu0 %v541, 15
  %v630 = vpop.permute.xlu0 %629
  %631 = vrot.lane.b32.xlu0 %v542, 15
  %v632 = vpop.permute.xlu0 %631
  %633 = vrot.lane.b32.xlu0 %v543, 15
  %v634 = vpop.permute.xlu0 %633
  %635 = vrot.lane.b32.xlu0 %v544, 15
  %v636 = vpop.permute.xlu0 %635
  %v637 = vsel %vm119, %v634, %v636
  %v638 = vsel %vm119, %v632, %v634
  %v639 = vsel %vm119, %v630, %v632
  %v640 = vsel %vm119, %v636, %v630
  %v641 = vld [vmem:[%s124] ss:$8 sm:$0xf]
  %v643 = vlaneseq
  %v644 = vshrl.u32 %v643, 7
  %v645 = vsub.s32 0, %v644
  %v646 = vrot.slane %v641, %v645
  %v647 = vlaneseq
  %v648 = vshrl.u32 %v647, 7
  %v649 = vsub.s32 1, %v648
  %v650 = vrot.slane %v641, %v649
  %v651 = vlaneseq
  %v652 = vshrl.u32 %v651, 7
  %v653 = vsub.s32 2, %v652
  %v654 = vrot.slane %v641, %v653
  %v655 = vlaneseq
  %v656 = vshrl.u32 %v655, 7
  %v657 = vsub.s32 3, %v656
  %v658 = vrot.slane %v641, %v657
  %v663 = vmul.f32 %v640, %v646
  %v664 = vmul.f32 %v639, %v650
  %v665 = vmul.f32 %v638, %v654
  %v666 = vmul.f32 %v637, %v658
  %667 = vst [vmem:[#allocation2 + $0x40] sm:$0xff] %v663
  %668 = vst [vmem:[#allocation2 + $0x48] sm:$0xff] %v664
  %669 = vst [vmem:[#allocation2 + $0x50] sm:$0xff] %v665
  %670 = vst [vmem:[#allocation2 + $0x58] sm:$0xff] %v666
  %671 = vrot.lane.b32.xlu0 %v541, 1
  %v672 = vpop.permute.xlu0 %671
  %673 = vrot.lane.b32.xlu0 %v542, 1
  %v674 = vpop.permute.xlu0 %673
  %675 = vrot.lane.b32.xlu0 %v543, 1
  %v676 = vpop.permute.xlu0 %675
  %677 = vrot.lane.b32.xlu0 %v544, 1
  %v678 = vpop.permute.xlu0 %677
  %v679 = vsel %vm163, %v676, %v678
  %v680 = vsel %vm163, %v674, %v676
  %v681 = vsel %vm163, %v672, %v674
  %v682 = vsel %vm163, %v678, %v672
  %v683 = vld [vmem:[%s168] ss:$8 sm:$0xf]
  %v685 = vlaneseq
  %v686 = vshrl.u32 %v685, 7
  %v687 = vsub.s32 0, %v686
  %v688 = vrot.slane %v683, %v687
  %v689 = vlaneseq
  %v690 = vshrl.u32 %v689, 7
  %v691 = vsub.s32 1, %v690
  %v692 = vrot.slane %v683, %v691
  %v693 = vlaneseq
  %v694 = vshrl.u32 %v693, 7
  %v695 = vsub.s32 2, %v694
  %v696 = vrot.slane %v683, %v695
  %v697 = vlaneseq
  %v698 = vshrl.u32 %v697, 7
  %v699 = vsub.s32 3, %v698
  %v700 = vrot.slane %v683, %v699
  %v705 = vmul.f32 %v682, %v688
  %v706 = vmul.f32 %v681, %v692
  %v707 = vmul.f32 %v680, %v696
  %v708 = vmul.f32 %v679, %v700
  %709 = vst [vmem:[#allocation2 + $0x60] sm:$0xff] %v705
  %710 = vst [vmem:[#allocation2 + $0x68] sm:$0xff] %v706
  %711 = vst [vmem:[#allocation2 + $0x70] sm:$0xff] %v707
  %712 = vst [vmem:[#allocation2 + $0x78] sm:$0xff] %v708
  %713 = vst [vmem:[#allocation2 + $0x80] sm:$0xff] %v541
  %714 = vst [vmem:[#allocation2 + $0x88] sm:$0xff] %v542
  %715 = vst [vmem:[#allocation2 + $0x90] sm:$0xff] %v543
  %716 = vst [vmem:[#allocation2 + $0x98] sm:$0xff] %v544
  %717 = vrot.lane.b32.xlu0 %v541, 127
  %v718 = vpop.permute.xlu0 %717
  %719 = vrot.lane.b32.xlu0 %v542, 127
  %v720 = vpop.permute.xlu0 %719
  %721 = vrot.lane.b32.xlu0 %v543, 127
  %v722 = vpop.permute.xlu0 %721
  %723 = vrot.lane.b32.xlu0 %v544, 127
  %v724 = vpop.permute.xlu0 %723
  %v725 = vsel %vm211, %v722, %v724
  %v726 = vsel %vm211, %v720, %v722
  %v727 = vsel %vm211, %v718, %v720
  %v728 = vsel %vm211, %v724, %v718
  %v729 = vld [vmem:[%s216] ss:$8 sm:$0xf]
  %v731 = vlaneseq
  %v732 = vshrl.u32 %v731, 7
  %v733 = vsub.s32 0, %v732
  %v734 = vrot.slane %v729, %v733
  %v735 = vlaneseq
  %v736 = vshrl.u32 %v735, 7
  %v737 = vsub.s32 1, %v736
  %v738 = vrot.slane %v729, %v737
  %v739 = vlaneseq
  %v740 = vshrl.u32 %v739, 7
  %v741 = vsub.s32 2, %v740
  %v742 = vrot.slane %v729, %v741
  %v743 = vlaneseq
  %v744 = vshrl.u32 %v743, 7
  %v745 = vsub.s32 3, %v744
  %v746 = vrot.slane %v729, %v745
  %v751 = vmul.f32 %v727, %v734
  %v752 = vmul.f32 %v726, %v738
  %v753 = vmul.f32 %v725, %v742
  %v754 = vmul.f32 %v728, %v746
  %755 = vst [vmem:[#allocation2 + $0xa0] sm:$0xff] %v751
  %756 = vst [vmem:[#allocation2 + $0xa8] sm:$0xff] %v752
  %757 = vst [vmem:[#allocation2 + $0xb0] sm:$0xff] %v753
  %758 = vst [vmem:[#allocation2 + $0xb8] sm:$0xff] %v754
  %759 = vrot.lane.b32.xlu0 %v541, 113
  %v760 = vpop.permute.xlu0 %759
  %761 = vrot.lane.b32.xlu0 %v542, 113
  %v762 = vpop.permute.xlu0 %761
  %763 = vrot.lane.b32.xlu0 %v543, 113
  %v764 = vpop.permute.xlu0 %763
  %765 = vrot.lane.b32.xlu0 %v544, 113
  %v766 = vpop.permute.xlu0 %765
  %v767 = vsel %vm255, %v764, %v766
  %v768 = vsel %vm255, %v762, %v764
  %v769 = vsel %vm255, %v760, %v762
  %v770 = vsel %vm255, %v766, %v760
  %v771 = vld [vmem:[%s260] ss:$8 sm:$0xf]
  %v773 = vlaneseq
  %v774 = vshrl.u32 %v773, 7
  %v775 = vsub.s32 0, %v774
  %v776 = vrot.slane %v771, %v775
  %v777 = vlaneseq
  %v778 = vshrl.u32 %v777, 7
  %v779 = vsub.s32 1, %v778
  %v780 = vrot.slane %v771, %v779
  %v781 = vlaneseq
  %v782 = vshrl.u32 %v781, 7
  %v783 = vsub.s32 2, %v782
  %v784 = vrot.slane %v771, %v783
  %v785 = vlaneseq
  %v786 = vshrl.u32 %v785, 7
  %v787 = vsub.s32 3, %v786
  %v788 = vrot.slane %v771, %v787
  %v793 = vmul.f32 %v769, %v776
  %v794 = vmul.f32 %v768, %v780
  %v795 = vmul.f32 %v767, %v784
  %v796 = vmul.f32 %v770, %v788
  %797 = vst [vmem:[#allocation2 + $0xc0] sm:$0xff] %v793
  %798 = vst [vmem:[#allocation2 + $0xc8] sm:$0xff] %v794
  %799 = vst [vmem:[#allocation2 + $0xd0] sm:$0xff] %v795
  %800 = vst [vmem:[#allocation2 + $0xd8] sm:$0xff] %v796
  %801 = vrot.lane.b32.xlu0 %v541, 112
  %v802 = vpop.permute.xlu0 %801
  %803 = vrot.lane.b32.xlu0 %v542, 112
  %v804 = vpop.permute.xlu0 %803
  %805 = vrot.lane.b32.xlu0 %v543, 112
  %v806 = vpop.permute.xlu0 %805
  %807 = vrot.lane.b32.xlu0 %v544, 112
  %v808 = vpop.permute.xlu0 %807
  %v809 = vsel %vm299, %v806, %v808
  %v810 = vsel %vm299, %v804, %v806
  %v811 = vsel %vm299, %v802, %v804
  %v812 = vsel %vm299, %v808, %v802
  %v813 = vld [vmem:[%s304] ss:$8 sm:$0xf]
  %v815 = vlaneseq
  %v816 = vshrl.u32 %v815, 7
  %v817 = vsub.s32 0, %v816
  %v818 = vrot.slane %v813, %v817
  %v819 = vlaneseq
  %v820 = vshrl.u32 %v819, 7
  %v821 = vsub.s32 1, %v820
  %v822 = vrot.slane %v813, %v821
  %v823 = vlaneseq
  %v824 = vshrl.u32 %v823, 7
  %v825 = vsub.s32 2, %v824
  %v826 = vrot.slane %v813, %v825
  %v827 = vlaneseq
  %v828 = vshrl.u32 %v827, 7
  %v829 = vsub.s32 3, %v828
  %v830 = vrot.slane %v813, %v829
  %v835 = vmul.f32 %v811, %v818
  %v836 = vmul.f32 %v810, %v822
  %v837 = vmul.f32 %v809, %v826
  %v838 = vmul.f32 %v812, %v830
  %839 = vst [vmem:[#allocation2 + $0xe0] sm:$0xff] %v835
  %840 = vst [vmem:[#allocation2 + $0xe8] sm:$0xff] %v836
  %841 = vst [vmem:[#allocation2 + $0xf0] sm:$0xff] %v837
  %842 = vst [vmem:[#allocation2 + $0xf8] sm:$0xff] %v838
  %843 = vrot.lane.b32.xlu0 %v541, 111
  %v844 = vpop.permute.xlu0 %843
  %845 = vrot.lane.b32.xlu0 %v542, 111
  %v846 = vpop.permute.xlu0 %845
  %847 = vrot.lane.b32.xlu0 %v543, 111
  %v848 = vpop.permute.xlu0 %847
  %849 = vrot.lane.b32.xlu0 %v544, 111
  %v850 = vpop.permute.xlu0 %849
  %v851 = vsel %vm343, %v848, %v850
  %v852 = vsel %vm343, %v846, %v848
  %v853 = vsel %vm343, %v844, %v846
  %v854 = vsel %vm343, %v850, %v844
  %v855 = vld [vmem:[%s348] ss:$8 sm:$0xf]
  %v857 = vlaneseq
  %v858 = vshrl.u32 %v857, 7
  %v859 = vsub.s32 0, %v858
  %v860 = vrot.slane %v855, %v859
  %v861 = vlaneseq
  %v862 = vshrl.u32 %v861, 7
  %v863 = vsub.s32 1, %v862
  %v864 = vrot.slane %v855, %v863
  %v865 = vlaneseq
  %v866 = vshrl.u32 %v865, 7
  %v867 = vsub.s32 2, %v866
  %v868 = vrot.slane %v855, %v867
  %v869 = vlaneseq
  %v870 = vshrl.u32 %v869, 7
  %v871 = vsub.s32 3, %v870
  %v872 = vrot.slane %v855, %v871
  %v877 = vmul.f32 %v853, %v860
  %v878 = vmul.f32 %v852, %v864
  %v879 = vmul.f32 %v851, %v868
  %v880 = vmul.f32 %v854, %v872
  %881 = vst [vmem:[#allocation2 + $0x100] sm:$0xff] %v877
  %882 = vst [vmem:[#allocation2 + $0x108] sm:$0xff] %v878
  %883 = vst [vmem:[#allocation2 + $0x110] sm:$0xff] %v879
  %884 = vst [vmem:[#allocation2 + $0x118] sm:$0xff] %v880
  %v885 = vld [vmem:[#allocation2] sm:$0xff]
  %v886 = vld [vmem:[#allocation2 + $0x8] sm:$0xff]
  %v887 = vld [vmem:[#allocation2 + $0x10] sm:$0xff]
  %v888 = vld [vmem:[#allocation2 + $0x18] sm:$0xff]
  %v889 = vld [vmem:[#allocation2 + $0x20] sm:$0xff]
  %v890 = vld [vmem:[#allocation2 + $0x28] sm:$0xff]
  %v891 = vld [vmem:[#allocation2 + $0x30] sm:$0xff]
  %v892 = vld [vmem:[#allocation2 + $0x38] sm:$0xff]
  %v893 = vld [vmem:[#allocation2 + $0x40] sm:$0xff]
  %v894 = vld [vmem:[#allocation2 + $0x48] sm:$0xff]
  %v895 = vld [vmem:[#allocation2 + $0x50] sm:$0xff]
  %v896 = vld [vmem:[#allocation2 + $0x58] sm:$0xff]
  %v897 = vld [vmem:[#allocation2 + $0x60] sm:$0xff]
  %v898 = vld [vmem:[#allocation2 + $0x68] sm:$0xff]
  %v899 = vld [vmem:[#allocation2 + $0x70] sm:$0xff]
  %v900 = vld [vmem:[#allocation2 + $0x78] sm:$0xff]
  %v901 = vld [vmem:[#allocation2 + $0x80] sm:$0xff]
  %v902 = vld [vmem:[#allocation2 + $0x88] sm:$0xff]
  %v903 = vld [vmem:[#allocation2 + $0x90] sm:$0xff]
  %v904 = vld [vmem:[#allocation2 + $0x98] sm:$0xff]
  %v905 = vld [vmem:[#allocation2 + $0xa0] sm:$0xff]
  %v906 = vld [vmem:[#allocation2 + $0xa8] sm:$0xff]
  %v907 = vld [vmem:[#allocation2 + $0xb0] sm:$0xff]
  %v908 = vld [vmem:[#allocation2 + $0xb8] sm:$0xff]
  %v909 = vld [vmem:[#allocation2 + $0xc0] sm:$0xff]
  %v910 = vld [vmem:[#allocation2 + $0xc8] sm:$0xff]
  %v911 = vld [vmem:[#allocation2 + $0xd0] sm:$0xff]
  %v912 = vld [vmem:[#allocation2 + $0xd8] sm:$0xff]
  %v913 = vld [vmem:[#allocation2 + $0xe0] sm:$0xff]
  %v914 = vld [vmem:[#allocation2 + $0xe8] sm:$0xff]
  %v915 = vld [vmem:[#allocation2 + $0xf0] sm:$0xff]
  %v916 = vld [vmem:[#allocation2 + $0xf8] sm:$0xff]
  %v917 = vld [vmem:[#allocation2 + $0x100] sm:$0xff]
  %v918 = vld [vmem:[#allocation2 + $0x108] sm:$0xff]
  %v919 = vld [vmem:[#allocation2 + $0x110] sm:$0xff]
  %v920 = vld [vmem:[#allocation2 + $0x118] sm:$0xff]
  %v921 = vpack.c.bf16 %v889, %v885
  %v922 = vpack.c.bf16 %v890, %v886
  %v923 = vpack.c.bf16 %v891, %v887
  %v924 = vpack.c.bf16 %v892, %v888
  %v925 = vpack.c.bf16 %v897, %v893
  %v926 = vpack.c.bf16 %v898, %v894
  %v927 = vpack.c.bf16 %v899, %v895
  %v928 = vpack.c.bf16 %v900, %v896
  %v929 = vpack.c.bf16 %v905, %v901
  %v930 = vpack.c.bf16 %v906, %v902
  %v931 = vpack.c.bf16 %v907, %v903
  %v932 = vpack.c.bf16 %v908, %v904
  %v933 = vpack.c.bf16 %v913, %v909
  %v934 = vpack.c.bf16 %v914, %v910
  %v935 = vpack.c.bf16 %v915, %v911
  %v936 = vpack.c.bf16 %v916, %v912
  %v937 = vpack.c.bf16 %v917, %v917
  %v938 = vpack.c.bf16 %v918, %v918
  %v939 = vpack.c.bf16 %v919, %v919
  %v940 = vpack.c.bf16 %v920, %v920
  %s941 = scalar_lea.vmem %s2, 4
  %v942 = vld [vmem:[%s941] sm:$0xf]
  %s943 = scalar_lea.vmem %s3, 8
  %v944 = vld [vmem:[%s943] sm:$0xff]
  %946 = vset.pattern.permute.xlu0 0
  %947 = vperm.xlu0 %946, %v944
  %v948 = vpop.permute.xlu0 %947
  %v951 = vsel %vm442, %v942, 0
  %v954 = vsel %vm446, %v937, 0
  %v957 = vsel %vm446, %v938, 0
  %v960 = vsel %vm446, %v939, 0
  %v963 = vsel %vm446, %v940, 0
  %965 = vmatprep.subr.bf16.mxu0 0
  %966 = vmatpush1.bf16.msra.mxu0 0
  %967 = vmatprep.subr.bf16.mxu0 0
  %968 = vmatpush1.bf16.msra.mxu0 0
  %969 = vmatprep.subr.bf16.mxu0 0
  %970 = vmatpush1.bf16.msra.mxu0 0
  %971 = vmatprep.subr.bf16.mxu0 %v957
  %972 = vmatpush1.bf16.msra.mxu0 %v954
  %973 = vmatprep.subr.bf16.mxu0 %v934
  %974 = vmatpush1.bf16.msra.mxu0 %v933
  %975 = vmatprep.subr.bf16.mxu0 %v930
  %976 = vmatpush1.bf16.msra.mxu0 %v929
  %977 = vmatprep.subr.bf16.mxu0 %v926
  %978 = vmatpush1.bf16.msra.mxu0 %v925
  %979 = vmatprep.subr.bf16.mxu0 %v922
  %980 = vmatpush1.bf16.msra.mxu0 %v921
  %981 = vmatprep.subr.bf16.mxu0 0
  %982 = vmatpush2.bf16.msra.mxu0 0
  %983 = vmatprep.subr.bf16.mxu0 0
  %984 = vmatpush2.bf16.msra.mxu0 0
  %985 = vmatprep.subr.bf16.mxu0 0
  %986 = vmatpush2.bf16.msra.mxu0 0
  %987 = vmatprep.subr.bf16.mxu0 0
  %988 = vmatpush2.bf16.msra.mxu0 0
  %989 = vmatprep.subr.bf16.mxu0 0
  %990 = vmatpush2.bf16.msra.mxu0 0
  %991 = vmatprep.subr.bf16.mxu0 0
  %992 = vmatpush2.bf16.msra.mxu0 0
  %993 = vmatprep.subr.bf16.mxu0 0
  %994 = vmatpush2.bf16.msra.mxu0 0
  %995 = vmatprep.subr.bf16.mxu0 0
  %996 = vmatpush2.bf16.msra.mxu0 0
  %997 = vmatprep.mubr.bf16.mxu0 0
  %998 = vmatmul.mubr.bf16.gmra.mxu0 %v951
  %v999 = vpop.f32.mrf.mxu0
  %v1000 = vadd.f32 %v948, %v999
  %v1001 = vpop.f32.mrf.mxu0
  %v1002 = vadd.f32 %v948, %v1001
  %v1003 = vpop.f32.mrf.mxu0
  %v1004 = vpop.f32.mrf.mxu0
  %1005 = vdwg.mxu0
  %1006 = vmatprep.subr.bf16.mxu0 0
  %1007 = vmatpush1.bf16.msra.mxu0 0
  %1008 = vmatprep.subr.bf16.mxu0 0
  %1009 = vmatpush1.bf16.msra.mxu0 0
  %1010 = vmatprep.subr.bf16.mxu0 0
  %1011 = vmatpush1.bf16.msra.mxu0 0
  %1012 = vmatprep.subr.bf16.mxu0 %v963
  %1013 = vmatpush1.bf16.msra.mxu0 %v960
  %1014 = vmatprep.subr.bf16.mxu0 %v936
  %1015 = vmatpush1.bf16.msra.mxu0 %v935
  %1016 = vmatprep.subr.bf16.mxu0 %v932
  %1017 = vmatpush1.bf16.msra.mxu0 %v931
  %1018 = vmatprep.subr.bf16.mxu0 %v928
  %1019 = vmatpush1.bf16.msra.mxu0 %v927
  %1020 = vmatprep.subr.bf16.mxu0 %v924
  %1021 = vmatpush1.bf16.msra.mxu0 %v923
  %1022 = vmatprep.subr.bf16.mxu0 0
  %1023 = vmatpush2.bf16.msra.mxu0 0
  %1024 = vmatprep.subr.bf16.mxu0 0
  %1025 = vmatpush2.bf16.msra.mxu0 0
  %1026 = vmatprep.subr.bf16.mxu0 0
  %1027 = vmatpush2.bf16.msra.mxu0 0
  %1028 = vmatprep.subr.bf16.mxu0 0
  %1029 = vmatpush2.bf16.msra.mxu0 0
  %1030 = vmatprep.subr.bf16.mxu0 0
  %1031 = vmatpush2.bf16.msra.mxu0 0
  %1032 = vmatprep.subr.bf16.mxu0 0
  %1033 = vmatpush2.bf16.msra.mxu0 0
  %1034 = vmatprep.subr.bf16.mxu0 0
  %1035 = vmatpush2.bf16.msra.mxu0 0
  %1036 = vmatprep.subr.bf16.mxu0 0
  %1037 = vmatpush2.bf16.msra.mxu0 0
  %1038 = vmatprep.mubr.bf16.mxu0 0
  %1039 = vmatmul.mubr.bf16.gmra.mxu0 %v951
  %v1040 = vpop.f32.mrf.mxu0
  %v1041 = vadd.f32 %v948, %v1040
  %v1042 = vpop.f32.mrf.mxu0
  %v1043 = vadd.f32 %v948, %v1042
  %v1044 = vpop.f32.mrf.mxu0
  %v1045 = vpop.f32.mrf.mxu0
  %1046 = vdwg.mxu0
  %v1047 = vmax.f32 %v1000, 0.0
  %v1048 = vmax.f32 %v1002, 0.0
  %v1049 = vmax.f32 %v1041, 0.0
  %v1050 = vmax.f32 %v1043, 0.0
  %1051 = vrot.lane.b32.xlu0 %v1047, 17
  %v1052 = vpop.permute.xlu0 %1051
  %1053 = vrot.lane.b32.xlu0 %v1048, 17
  %v1054 = vpop.permute.xlu0 %1053
  %1055 = vrot.lane.b32.xlu0 %v1049, 17
  %v1056 = vpop.permute.xlu0 %1055
  %1057 = vrot.lane.b32.xlu0 %v1050, 17
  %v1058 = vpop.permute.xlu0 %1057
  %v1059 = vsel %vm32, %v1056, %v1058
  %v1060 = vsel %vm32, %v1054, %v1056
  %v1061 = vsel %vm32, %v1052, %v1054
  %v1062 = vsel %vm32, %v1058, %v1052
  %v1063 = vld [vmem:[%s1] ss:$8 sm:$0xf]
  %v1065 = vlaneseq
  %v1066 = vshrl.u32 %v1065, 7
  %v1067 = vsub.s32 0, %v1066
  %v1068 = vrot.slane %v1063, %v1067
  %v1069 = vlaneseq
  %v1070 = vshrl.u32 %v1069, 7
  %v1071 = vsub.s32 1, %v1070
  %v1072 = vrot.slane %v1063, %v1071
  %v1073 = vlaneseq
  %v1074 = vshrl.u32 %v1073, 7
  %v1075 = vsub.s32 2, %v1074
  %v1076 = vrot.slane %v1063, %v1075
  %v1077 = vlaneseq
  %v1078 = vshrl.u32 %v1077, 7
  %v1079 = vsub.s32 3, %v1078
  %v1080 = vrot.slane %v1063, %v1079
  %v1085 = vmul.f32 %v1062, %v1068
  %v1086 = vmul.f32 %v1061, %v1072
  %v1087 = vmul.f32 %v1060, %v1076
  %v1088 = vmul.f32 %v1059, %v1080
  %1089 = vst [vmem:[#allocation2] sm:$0xff] %v1085
  %1090 = vst [vmem:[#allocation2 + $0x8] sm:$0xff] %v1086
  %1091 = vst [vmem:[#allocation2 + $0x10] sm:$0xff] %v1087
  %1092 = vst [vmem:[#allocation2 + $0x18] sm:$0xff] %v1088
  %1093 = vrot.lane.b32.xlu0 %v1047, 16
  %v1094 = vpop.permute.xlu0 %1093
  %1095 = vrot.lane.b32.xlu0 %v1048, 16
  %v1096 = vpop.permute.xlu0 %1095
  %1097 = vrot.lane.b32.xlu0 %v1049, 16
  %v1098 = vpop.permute.xlu0 %1097
  %1099 = vrot.lane.b32.xlu0 %v1050, 16
  %v1100 = vpop.permute.xlu0 %1099
  %v1101 = vsel %vm75, %v1098, %v1100
  %v1102 = vsel %vm75, %v1096, %v1098
  %v1103 = vsel %vm75, %v1094, %v1096
  %v1104 = vsel %vm75, %v1100, %v1094
  %v1105 = vld [vmem:[%s80] ss:$8 sm:$0xf]
  %v1107 = vlaneseq
  %v1108 = vshrl.u32 %v1107, 7
  %v1109 = vsub.s32 0, %v1108
  %v1110 = vrot.slane %v1105, %v1109
  %v1111 = vlaneseq
  %v1112 = vshrl.u32 %v1111, 7
  %v1113 = vsub.s32 1, %v1112
  %v1114 = vrot.slane %v1105, %v1113
  %v1115 = vlaneseq
  %v1116 = vshrl.u32 %v1115, 7
  %v1117 = vsub.s32 2, %v1116
  %v1118 = vrot.slane %v1105, %v1117
  %v1119 = vlaneseq
  %v1120 = vshrl.u32 %v1119, 7
  %v1121 = vsub.s32 3, %v1120
  %v1122 = vrot.slane %v1105, %v1121
  %v1127 = vmul.f32 %v1104, %v1110
  %v1128 = vmul.f32 %v1103, %v1114
  %v1129 = vmul.f32 %v1102, %v1118
  %v1130 = vmul.f32 %v1101, %v1122
  %1131 = vst [vmem:[#allocation2 + $0x20] sm:$0xff] %v1127
  %1132 = vst [vmem:[#allocation2 + $0x28] sm:$0xff] %v1128
  %1133 = vst [vmem:[#allocation2 + $0x30] sm:$0xff] %v1129
  %1134 = vst [vmem:[#allocation2 + $0x38] sm:$0xff] %v1130
  %1135 = vrot.lane.b32.xlu0 %v1047, 15
  %v1136 = vpop.permute.xlu0 %1135
  %1137 = vrot.lane.b32.xlu0 %v1048, 15
  %v1138 = vpop.permute.xlu0 %1137
  %1139 = vrot.lane.b32.xlu0 %v1049, 15
  %v1140 = vpop.permute.xlu0 %1139
  %1141 = vrot.lane.b32.xlu0 %v1050, 15
  %v1142 = vpop.permute.xlu0 %1141
  %v1143 = vsel %vm119, %v1140, %v1142
  %v1144 = vsel %vm119, %v1138, %v1140
  %v1145 = vsel %vm119, %v1136, %v1138
  %v1146 = vsel %vm119, %v1142, %v1136
  %v1147 = vld [vmem:[%s124] ss:$8 sm:$0xf]
  %v1149 = vlaneseq
  %v1150 = vshrl.u32 %v1149, 7
  %v1151 = vsub.s32 0, %v1150
  %v1152 = vrot.slane %v1147, %v1151
  %v1153 = vlaneseq
  %v1154 = vshrl.u32 %v1153, 7
  %v1155 = vsub.s32 1, %v1154
  %v1156 = vrot.slane %v1147, %v1155
  %v1157 = vlaneseq
  %v1158 = vshrl.u32 %v1157, 7
  %v1159 = vsub.s32 2, %v1158
  %v1160 = vrot.slane %v1147, %v1159
  %v1161 = vlaneseq
  %v1162 = vshrl.u32 %v1161, 7
  %v1163 = vsub.s32 3, %v1162
  %v1164 = vrot.slane %v1147, %v1163
  %v1169 = vmul.f32 %v1146, %v1152
  %v1170 = vmul.f32 %v1145, %v1156
  %v1171 = vmul.f32 %v1144, %v1160
  %v1172 = vmul.f32 %v1143, %v1164
  %1173 = vst [vmem:[#allocation2 + $0x40] sm:$0xff] %v1169
  %1174 = vst [vmem:[#allocation2 + $0x48] sm:$0xff] %v1170
  %1175 = vst [vmem:[#allocation2 + $0x50] sm:$0xff] %v1171
  %1176 = vst [vmem:[#allocation2 + $0x58] sm:$0xff] %v1172
  %1177 = vrot.lane.b32.xlu0 %v1047, 1
  %v1178 = vpop.permute.xlu0 %1177
  %1179 = vrot.lane.b32.xlu0 %v1048, 1
  %v1180 = vpop.permute.xlu0 %1179
  %1181 = vrot.lane.b32.xlu0 %v1049, 1
  %v1182 = vpop.permute.xlu0 %1181
  %1183 = vrot.lane.b32.xlu0 %v1050, 1
  %v1184 = vpop.permute.xlu0 %1183
  %v1185 = vsel %vm163, %v1182, %v1184
  %v1186 = vsel %vm163, %v1180, %v1182
  %v1187 = vsel %vm163, %v1178, %v1180
  %v1188 = vsel %vm163, %v1184, %v1178
  %v1189 = vld [vmem:[%s168] ss:$8 sm:$0xf]
  %v1191 = vlaneseq
  %v1192 = vshrl.u32 %v1191, 7
  %v1193 = vsub.s32 0, %v1192
  %v1194 = vrot.slane %v1189, %v1193
  %v1195 = vlaneseq
  %v1196 = vshrl.u32 %v1195, 7
  %v1197 = vsub.s32 1, %v1196
  %v1198 = vrot.slane %v1189, %v1197
  %v1199 = vlaneseq
  %v1200 = vshrl.u32 %v1199, 7
  %v1201 = vsub.s32 2, %v1200
  %v1202 = vrot.slane %v1189, %v1201
  %v1203 = vlaneseq
  %v1204 = vshrl.u32 %v1203, 7
  %v1205 = vsub.s32 3, %v1204
  %v1206 = vrot.slane %v1189, %v1205
  %v1211 = vmul.f32 %v1188, %v1194
  %v1212 = vmul.f32 %v1187, %v1198
  %v1213 = vmul.f32 %v1186, %v1202
  %v1214 = vmul.f32 %v1185, %v1206
  %1215 = vst [vmem:[#allocation2 + $0x60] sm:$0xff] %v1211
  %1216 = vst [vmem:[#allocation2 + $0x68] sm:$0xff] %v1212
  %1217 = vst [vmem:[#allocation2 + $0x70] sm:$0xff] %v1213
  %1218 = vst [vmem:[#allocation2 + $0x78] sm:$0xff] %v1214
  %1219 = vst [vmem:[#allocation2 + $0x80] sm:$0xff] %v1047
  %1220 = vst [vmem:[#allocation2 + $0x88] sm:$0xff] %v1048
  %1221 = vst [vmem:[#allocation2 + $0x90] sm:$0xff] %v1049
  %1222 = vst [vmem:[#allocation2 + $0x98] sm:$0xff] %v1050
  %1223 = vrot.lane.b32.xlu0 %v1047, 127
  %v1224 = vpop.permute.xlu0 %1223
  %1225 = vrot.lane.b32.xlu0 %v1048, 127
  %v1226 = vpop.permute.xlu0 %1225
  %1227 = vrot.lane.b32.xlu0 %v1049, 127
  %v1228 = vpop.permute.xlu0 %1227
  %1229 = vrot.lane.b32.xlu0 %v1050, 127
  %v1230 = vpop.permute.xlu0 %1229
  %v1231 = vsel %vm211, %v1228, %v1230
  %v1232 = vsel %vm211, %v1226, %v1228
  %v1233 = vsel %vm211, %v1224, %v1226
  %v1234 = vsel %vm211, %v1230, %v1224
  %v1235 = vld [vmem:[%s216] ss:$8 sm:$0xf]
  %v1237 = vlaneseq
  %v1238 = vshrl.u32 %v1237, 7
  %v1239 = vsub.s32 0, %v1238
  %v1240 = vrot.slane %v1235, %v1239
  %v1241 = vlaneseq
  %v1242 = vshrl.u32 %v1241, 7
  %v1243 = vsub.s32 1, %v1242
  %v1244 = vrot.slane %v1235, %v1243
  %v1245 = vlaneseq
  %v1246 = vshrl.u32 %v1245, 7
  %v1247 = vsub.s32 2, %v1246
  %v1248 = vrot.slane %v1235, %v1247
  %v1249 = vlaneseq
  %v1250 = vshrl.u32 %v1249, 7
  %v1251 = vsub.s32 3, %v1250
  %v1252 = vrot.slane %v1235, %v1251
  %v1257 = vmul.f32 %v1233, %v1240
  %v1258 = vmul.f32 %v1232, %v1244
  %v1259 = vmul.f32 %v1231, %v1248
  %v1260 = vmul.f32 %v1234, %v1252
  %1261 = vst [vmem:[#allocation2 + $0xa0] sm:$0xff] %v1257
  %1262 = vst [vmem:[#allocation2 + $0xa8] sm:$0xff] %v1258
  %1263 = vst [vmem:[#allocation2 + $0xb0] sm:$0xff] %v1259
  %1264 = vst [vmem:[#allocation2 + $0xb8] sm:$0xff] %v1260
  %1265 = vrot.lane.b32.xlu0 %v1047, 113
  %v1266 = vpop.permute.xlu0 %1265
  %1267 = vrot.lane.b32.xlu0 %v1048, 113
  %v1268 = vpop.permute.xlu0 %1267
  %1269 = vrot.lane.b32.xlu0 %v1049, 113
  %v1270 = vpop.permute.xlu0 %1269
  %1271 = vrot.lane.b32.xlu0 %v1050, 113
  %v1272 = vpop.permute.xlu0 %1271
  %v1273 = vsel %vm255, %v1270, %v1272
  %v1274 = vsel %vm255, %v1268, %v1270
  %v1275 = vsel %vm255, %v1266, %v1268
  %v1276 = vsel %vm255, %v1272, %v1266
  %v1277 = vld [vmem:[%s260] ss:$8 sm:$0xf]
  %v1279 = vlaneseq
  %v1280 = vshrl.u32 %v1279, 7
  %v1281 = vsub.s32 0, %v1280
  %v1282 = vrot.slane %v1277, %v1281
  %v1283 = vlaneseq
  %v1284 = vshrl.u32 %v1283, 7
  %v1285 = vsub.s32 1, %v1284
  %v1286 = vrot.slane %v1277, %v1285
  %v1287 = vlaneseq
  %v1288 = vshrl.u32 %v1287, 7
  %v1289 = vsub.s32 2, %v1288
  %v1290 = vrot.slane %v1277, %v1289
  %v1291 = vlaneseq
  %v1292 = vshrl.u32 %v1291, 7
  %v1293 = vsub.s32 3, %v1292
  %v1294 = vrot.slane %v1277, %v1293
  %v1299 = vmul.f32 %v1275, %v1282
  %v1300 = vmul.f32 %v1274, %v1286
  %v1301 = vmul.f32 %v1273, %v1290
  %v1302 = vmul.f32 %v1276, %v1294
  %1303 = vst [vmem:[#allocation2 + $0xc0] sm:$0xff] %v1299
  %1304 = vst [vmem:[#allocation2 + $0xc8] sm:$0xff] %v1300
  %1305 = vst [vmem:[#allocation2 + $0xd0] sm:$0xff] %v1301
  %1306 = vst [vmem:[#allocation2 + $0xd8] sm:$0xff] %v1302
  %1307 = vrot.lane.b32.xlu0 %v1047, 112
  %v1308 = vpop.permute.xlu0 %1307
  %1309 = vrot.lane.b32.xlu0 %v1048, 112
  %v1310 = vpop.permute.xlu0 %1309
  %1311 = vrot.lane.b32.xlu0 %v1049, 112
  %v1312 = vpop.permute.xlu0 %1311
  %1313 = vrot.lane.b32.xlu0 %v1050, 112
  %v1314 = vpop.permute.xlu0 %1313
  %v1315 = vsel %vm299, %v1312, %v1314
  %v1316 = vsel %vm299, %v1310, %v1312
  %v1317 = vsel %vm299, %v1308, %v1310
  %v1318 = vsel %vm299, %v1314, %v1308
  %v1319 = vld [vmem:[%s304] ss:$8 sm:$0xf]
  %v1321 = vlaneseq
  %v1322 = vshrl.u32 %v1321, 7
  %v1323 = vsub.s32 0, %v1322
  %v1324 = vrot.slane %v1319, %v1323
  %v1325 = vlaneseq
  %v1326 = vshrl.u32 %v1325, 7
  %v1327 = vsub.s32 1, %v1326
  %v1328 = vrot.slane %v1319, %v1327
  %v1329 = vlaneseq
  %v1330 = vshrl.u32 %v1329, 7
  %v1331 = vsub.s32 2, %v1330
  %v1332 = vrot.slane %v1319, %v1331
  %v1333 = vlaneseq
  %v1334 = vshrl.u32 %v1333, 7
  %v1335 = vsub.s32 3, %v1334
  %v1336 = vrot.slane %v1319, %v1335
  %v1341 = vmul.f32 %v1317, %v1324
  %v1342 = vmul.f32 %v1316, %v1328
  %v1343 = vmul.f32 %v1315, %v1332
  %v1344 = vmul.f32 %v1318, %v1336
  %1345 = vst [vmem:[#allocation2 + $0xe0] sm:$0xff] %v1341
  %1346 = vst [vmem:[#allocation2 + $0xe8] sm:$0xff] %v1342
  %1347 = vst [vmem:[#allocation2 + $0xf0] sm:$0xff] %v1343
  %1348 = vst [vmem:[#allocation2 + $0xf8] sm:$0xff] %v1344
  %1349 = vrot.lane.b32.xlu0 %v1047, 111
  %v1350 = vpop.permute.xlu0 %1349
  %1351 = vrot.lane.b32.xlu0 %v1048, 111
  %v1352 = vpop.permute.xlu0 %1351
  %1353 = vrot.lane.b32.xlu0 %v1049, 111
  %v1354 = vpop.permute.xlu0 %1353
  %1355 = vrot.lane.b32.xlu0 %v1050, 111
  %v1356 = vpop.permute.xlu0 %1355
  %v1357 = vsel %vm343, %v1354, %v1356
  %v1358 = vsel %vm343, %v1352, %v1354
  %v1359 = vsel %vm343, %v1350, %v1352
  %v1360 = vsel %vm343, %v1356, %v1350
  %v1361 = vld [vmem:[%s348] ss:$8 sm:$0xf]
  %v1363 = vlaneseq
  %v1364 = vshrl.u32 %v1363, 7
  %v1365 = vsub.s32 0, %v1364
  %v1366 = vrot.slane %v1361, %v1365
  %v1367 = vlaneseq
  %v1368 = vshrl.u32 %v1367, 7
  %v1369 = vsub.s32 1, %v1368
  %v1370 = vrot.slane %v1361, %v1369
  %v1371 = vlaneseq
  %v1372 = vshrl.u32 %v1371, 7
  %v1373 = vsub.s32 2, %v1372
  %v1374 = vrot.slane %v1361, %v1373
  %v1375 = vlaneseq
  %v1376 = vshrl.u32 %v1375, 7
  %v1377 = vsub.s32 3, %v1376
  %v1378 = vrot.slane %v1361, %v1377
  %v1383 = vmul.f32 %v1359, %v1366
  %v1384 = vmul.f32 %v1358, %v1370
  %v1385 = vmul.f32 %v1357, %v1374
  %v1386 = vmul.f32 %v1360, %v1378
  %1387 = vst [vmem:[#allocation2 + $0x100] sm:$0xff] %v1383
  %1388 = vst [vmem:[#allocation2 + $0x108] sm:$0xff] %v1384
  %1389 = vst [vmem:[#allocation2 + $0x110] sm:$0xff] %v1385
  %1390 = vst [vmem:[#allocation2 + $0x118] sm:$0xff] %v1386
  %v1391 = vld [vmem:[#allocation2] sm:$0xff]
  %v1392 = vld [vmem:[#allocation2 + $0x8] sm:$0xff]
  %v1393 = vld [vmem:[#allocation2 + $0x10] sm:$0xff]
  %v1394 = vld [vmem:[#allocation2 + $0x18] sm:$0xff]
  %v1395 = vld [vmem:[#allocation2 + $0x20] sm:$0xff]
  %v1396 = vld [vmem:[#allocation2 + $0x28] sm:$0xff]
  %v1397 = vld [vmem:[#allocation2 + $0x30] sm:$0xff]
  %v1398 = vld [vmem:[#allocation2 + $0x38] sm:$0xff]
  %v1399 = vld [vmem:[#allocation2 + $0x40] sm:$0xff]
  %v1400 = vld [vmem:[#allocation2 + $0x48] sm:$0xff]
  %v1401 = vld [vmem:[#allocation2 + $0x50] sm:$0xff]
  %v1402 = vld [vmem:[#allocation2 + $0x58] sm:$0xff]
  %v1403 = vld [vmem:[#allocation2 + $0x60] sm:$0xff]
  %v1404 = vld [vmem:[#allocation2 + $0x68] sm:$0xff]
  %v1405 = vld [vmem:[#allocation2 + $0x70] sm:$0xff]
  %v1406 = vld [vmem:[#allocation2 + $0x78] sm:$0xff]
  %v1407 = vld [vmem:[#allocation2 + $0x80] sm:$0xff]
  %v1408 = vld [vmem:[#allocation2 + $0x88] sm:$0xff]
  %v1409 = vld [vmem:[#allocation2 + $0x90] sm:$0xff]
  %v1410 = vld [vmem:[#allocation2 + $0x98] sm:$0xff]
  %v1411 = vld [vmem:[#allocation2 + $0xa0] sm:$0xff]
  %v1412 = vld [vmem:[#allocation2 + $0xa8] sm:$0xff]
  %v1413 = vld [vmem:[#allocation2 + $0xb0] sm:$0xff]
  %v1414 = vld [vmem:[#allocation2 + $0xb8] sm:$0xff]
  %v1415 = vld [vmem:[#allocation2 + $0xc0] sm:$0xff]
  %v1416 = vld [vmem:[#allocation2 + $0xc8] sm:$0xff]
  %v1417 = vld [vmem:[#allocation2 + $0xd0] sm:$0xff]
  %v1418 = vld [vmem:[#allocation2 + $0xd8] sm:$0xff]
  %v1419 = vld [vmem:[#allocation2 + $0xe0] sm:$0xff]
  %v1420 = vld [vmem:[#allocation2 + $0xe8] sm:$0xff]
  %v1421 = vld [vmem:[#allocation2 + $0xf0] sm:$0xff]
  %v1422 = vld [vmem:[#allocation2 + $0xf8] sm:$0xff]
  %v1423 = vld [vmem:[#allocation2 + $0x100] sm:$0xff]
  %v1424 = vld [vmem:[#allocation2 + $0x108] sm:$0xff]
  %v1425 = vld [vmem:[#allocation2 + $0x110] sm:$0xff]
  %v1426 = vld [vmem:[#allocation2 + $0x118] sm:$0xff]
  %v1427 = vpack.c.bf16 %v1395, %v1391
  %v1428 = vpack.c.bf16 %v1396, %v1392
  %v1429 = vpack.c.bf16 %v1397, %v1393
  %v1430 = vpack.c.bf16 %v1398, %v1394
  %v1431 = vpack.c.bf16 %v1403, %v1399
  %v1432 = vpack.c.bf16 %v1404, %v1400
  %v1433 = vpack.c.bf16 %v1405, %v1401
  %v1434 = vpack.c.bf16 %v1406, %v1402
  %v1435 = vpack.c.bf16 %v1411, %v1407
  %v1436 = vpack.c.bf16 %v1412, %v1408
  %v1437 = vpack.c.bf16 %v1413, %v1409
  %v1438 = vpack.c.bf16 %v1414, %v1410
  %v1439 = vpack.c.bf16 %v1419, %v1415
  %v1440 = vpack.c.bf16 %v1420, %v1416
  %v1441 = vpack.c.bf16 %v1421, %v1417
  %v1442 = vpack.c.bf16 %v1422, %v1418
  %v1443 = vpack.c.bf16 %v1423, %v1423
  %v1444 = vpack.c.bf16 %v1424, %v1424
  %v1445 = vpack.c.bf16 %v1425, %v1425
  %v1446 = vpack.c.bf16 %v1426, %v1426
  %s1447 = scalar_lea.vmem %s2, 8
  %v1448 = vld [vmem:[%s1447] sm:$0xf]
  %s1449 = scalar_lea.vmem %s3, 16
  %v1450 = vld [vmem:[%s1449] sm:$0xff]
  %1452 = vset.pattern.permute.xlu0 0
  %1453 = vperm.xlu0 %1452, %v1450
  %v1454 = vpop.permute.xlu0 %1453
  %v1457 = vsel %vm442, %v1448, 0
  %v1460 = vsel %vm446, %v1443, 0
  %v1463 = vsel %vm446, %v1444, 0
  %v1466 = vsel %vm446, %v1445, 0
  %v1469 = vsel %vm446, %v1446, 0
  %1471 = vmatprep.subr.bf16.mxu0 0
  %1472 = vmatpush1.bf16.msra.mxu0 0
  %1473 = vmatprep.subr.bf16.mxu0 0
  %1474 = vmatpush1.bf16.msra.mxu0 0
  %1475 = vmatprep.subr.bf16.mxu0 0
  %1476 = vmatpush1.bf16.msra.mxu0 0
  %1477 = vmatprep.subr.bf16.mxu0 %v1463
  %1478 = vmatpush1.bf16.msra.mxu0 %v1460
  %1479 = vmatprep.subr.bf16.mxu0 %v1440
  %1480 = vmatpush1.bf16.msra.mxu0 %v1439
  %1481 = vmatprep.subr.bf16.mxu0 %v1436
  %1482 = vmatpush1.bf16.msra.mxu0 %v1435
  %1483 = vmatprep.subr.bf16.mxu0 %v1432
  %1484 = vmatpush1.bf16.msra.mxu0 %v1431
  %1485 = vmatprep.subr.bf16.mxu0 %v1428
  %1486 = vmatpush1.bf16.msra.mxu0 %v1427
  %1487 = vmatprep.subr.bf16.mxu0 0
  %1488 = vmatpush2.bf16.msra.mxu0 0
  %1489 = vmatprep.subr.bf16.mxu0 0
  %1490 = vmatpush2.bf16.msra.mxu0 0
  %1491 = vmatprep.subr.bf16.mxu0 0
  %1492 = vmatpush2.bf16.msra.mxu0 0
  %1493 = vmatprep.subr.bf16.mxu0 0
  %1494 = vmatpush2.bf16.msra.mxu0 0
  %1495 = vmatprep.subr.bf16.mxu0 0
  %1496 = vmatpush2.bf16.msra.mxu0 0
  %1497 = vmatprep.subr.bf16.mxu0 0
  %1498 = vmatpush2.bf16.msra.mxu0 0
  %1499 = vmatprep.subr.bf16.mxu0 0
  %1500 = vmatpush2.bf16.msra.mxu0 0
  %1501 = vmatprep.subr.bf16.mxu0 0
  %1502 = vmatpush2.bf16.msra.mxu0 0
  %1503 = vmatprep.mubr.bf16.mxu0 0
  %1504 = vmatmul.mubr.bf16.gmra.mxu0 %v1457
  %v1505 = vpop.f32.mrf.mxu0
  %v1506 = vadd.f32 %v1454, %v1505
  %v1507 = vpop.f32.mrf.mxu0
  %v1508 = vadd.f32 %v1454, %v1507
  %v1509 = vpop.f32.mrf.mxu0
  %v1510 = vpop.f32.mrf.mxu0
  %1511 = vdwg.mxu0
  %1512 = vmatprep.subr.bf16.mxu0 0
  %1513 = vmatpush1.bf16.msra.mxu0 0
  %1514 = vmatprep.subr.bf16.mxu0 0
  %1515 = vmatpush1.bf16.msra.mxu0 0
  %1516 = vmatprep.subr.bf16.mxu0 0
  %1517 = vmatpush1.bf16.msra.mxu0 0
  %1518 = vmatprep.subr.bf16.mxu0 %v1469
  %1519 = vmatpush1.bf16.msra.mxu0 %v1466
  %1520 = vmatprep.subr.bf16.mxu0 %v1442
  %1521 = vmatpush1.bf16.msra.mxu0 %v1441
  %1522 = vmatprep.subr.bf16.mxu0 %v1438
  %1523 = vmatpush1.bf16.msra.mxu0 %v1437
  %1524 = vmatprep.subr.bf16.mxu0 %v1434
  %1525 = vmatpush1.bf16.msra.mxu0 %v1433
  %1526 = vmatprep.subr.bf16.mxu0 %v1430
  %1527 = vmatpush1.bf16.msra.mxu0 %v1429
  %1528 = vmatprep.subr.bf16.mxu0 0
  %1529 = vmatpush2.bf16.msra.mxu0 0
  %1530 = vmatprep.subr.bf16.mxu0 0
  %1531 = vmatpush2.bf16.msra.mxu0 0
  %1532 = vmatprep.subr.bf16.mxu0 0
  %1533 = vmatpush2.bf16.msra.mxu0 0
  %1534 = vmatprep.subr.bf16.mxu0 0
  %1535 = vmatpush2.bf16.msra.mxu0 0
  %1536 = vmatprep.subr.bf16.mxu0 0
  %1537 = vmatpush2.bf16.msra.mxu0 0
  %1538 = vmatprep.subr.bf16.mxu0 0
  %1539 = vmatpush2.bf16.msra.mxu0 0
  %1540 = vmatprep.subr.bf16.mxu0 0
  %1541 = vmatpush2.bf16.msra.mxu0 0
  %1542 = vmatprep.subr.bf16.mxu0 0
  %1543 = vmatpush2.bf16.msra.mxu0 0
  %1544 = vmatprep.mubr.bf16.mxu0 0
  %1545 = vmatmul.mubr.bf16.gmra.mxu0 %v1457
  %v1546 = vpop.f32.mrf.mxu0
  %v1547 = vadd.f32 %v1454, %v1546
  %v1548 = vpop.f32.mrf.mxu0
  %v1549 = vadd.f32 %v1454, %v1548
  %v1550 = vpop.f32.mrf.mxu0
  %v1551 = vpop.f32.mrf.mxu0
  %1552 = vdwg.mxu0
  %v1553 = vmax.f32 %v1506, 0.0
  %v1554 = vmax.f32 %v1508, 0.0
  %v1555 = vmax.f32 %v1547, 0.0
  %v1556 = vmax.f32 %v1549, 0.0
  %1557 = vrot.lane.b32.xlu0 %v1553, 17
  %v1558 = vpop.permute.xlu0 %1557
  %1559 = vrot.lane.b32.xlu0 %v1554, 17
  %v1560 = vpop.permute.xlu0 %1559
  %1561 = vrot.lane.b32.xlu0 %v1555, 17
  %v1562 = vpop.permute.xlu0 %1561
  %1563 = vrot.lane.b32.xlu0 %v1556, 17
  %v1564 = vpop.permute.xlu0 %1563
  %v1565 = vsel %vm32, %v1562, %v1564
  %v1566 = vsel %vm32, %v1560, %v1562
  %v1567 = vsel %vm32, %v1558, %v1560
  %v1568 = vsel %vm32, %v1564, %v1558
  %v1569 = vld [vmem:[%s1] ss:$8 sm:$0xf]
  %v1571 = vlaneseq
  %v1572 = vshrl.u32 %v1571, 7
  %v1573 = vsub.s32 0, %v1572
  %v1574 = vrot.slane %v1569, %v1573
  %v1575 = vlaneseq
  %v1576 = vshrl.u32 %v1575, 7
  %v1577 = vsub.s32 1, %v1576
  %v1578 = vrot.slane %v1569, %v1577
  %v1579 = vlaneseq
  %v1580 = vshrl.u32 %v1579, 7
  %v1581 = vsub.s32 2, %v1580
  %v1582 = vrot.slane %v1569, %v1581
  %v1583 = vlaneseq
  %v1584 = vshrl.u32 %v1583, 7
  %v1585 = vsub.s32 3, %v1584
  %v1586 = vrot.slane %v1569, %v1585
  %v1591 = vmul.f32 %v1568, %v1574
  %v1592 = vmul.f32 %v1567, %v1578
  %v1593 = vmul.f32 %v1566, %v1582
  %v1594 = vmul.f32 %v1565, %v1586
  %1595 = vst [vmem:[#allocation2] sm:$0xff] %v1591
  %1596 = vst [vmem:[#allocation2 + $0x8] sm:$0xff] %v1592
  %1597 = vst [vmem:[#allocation2 + $0x10] sm:$0xff] %v1593
  %1598 = vst [vmem:[#allocation2 + $0x18] sm:$0xff] %v1594
  %1599 = vrot.lane.b32.xlu0 %v1553, 16
  %v1600 = vpop.permute.xlu0 %1599
  %1601 = vrot.lane.b32.xlu0 %v1554, 16
  %v1602 = vpop.permute.xlu0 %1601
  %1603 = vrot.lane.b32.xlu0 %v1555, 16
  %v1604 = vpop.permute.xlu0 %1603
  %1605 = vrot.lane.b32.xlu0 %v1556, 16
  %v1606 = vpop.permute.xlu0 %1605
  %v1607 = vsel %vm75, %v1604, %v1606
  %v1608 = vsel %vm75, %v1602, %v1604
  %v1609 = vsel %vm75, %v1600, %v1602
  %v1610 = vsel %vm75, %v1606, %v1600
  %v1611 = vld [vmem:[%s80] ss:$8 sm:$0xf]
  %v1613 = vlaneseq
  %v1614 = vshrl.u32 %v1613, 7
  %v1615 = vsub.s32 0, %v1614
  %v1616 = vrot.slane %v1611, %v1615
  %v1617 = vlaneseq
  %v1618 = vshrl.u32 %v1617, 7
  %v1619 = vsub.s32 1, %v1618
  %v1620 = vrot.slane %v1611, %v1619
  %v1621 = vlaneseq
  %v1622 = vshrl.u32 %v1621, 7
  %v1623 = vsub.s32 2, %v1622
  %v1624 = vrot.slane %v1611, %v1623
  %v1625 = vlaneseq
  %v1626 = vshrl.u32 %v1625, 7
  %v1627 = vsub.s32 3, %v1626
  %v1628 = vrot.slane %v1611, %v1627
  %v1633 = vmul.f32 %v1610, %v1616
  %v1634 = vmul.f32 %v1609, %v1620
  %v1635 = vmul.f32 %v1608, %v1624
  %v1636 = vmul.f32 %v1607, %v1628
  %1637 = vst [vmem:[#allocation2 + $0x20] sm:$0xff] %v1633
  %1638 = vst [vmem:[#allocation2 + $0x28] sm:$0xff] %v1634
  %1639 = vst [vmem:[#allocation2 + $0x30] sm:$0xff] %v1635
  %1640 = vst [vmem:[#allocation2 + $0x38] sm:$0xff] %v1636
  %1641 = vrot.lane.b32.xlu0 %v1553, 15
  %v1642 = vpop.permute.xlu0 %1641
  %1643 = vrot.lane.b32.xlu0 %v1554, 15
  %v1644 = vpop.permute.xlu0 %1643
  %1645 = vrot.lane.b32.xlu0 %v1555, 15
  %v1646 = vpop.permute.xlu0 %1645
  %1647 = vrot.lane.b32.xlu0 %v1556, 15
  %v1648 = vpop.permute.xlu0 %1647
  %v1649 = vsel %vm119, %v1646, %v1648
  %v1650 = vsel %vm119, %v1644, %v1646
  %v1651 = vsel %vm119, %v1642, %v1644
  %v1652 = vsel %vm119, %v1648, %v1642
  %v1653 = vld [vmem:[%s124] ss:$8 sm:$0xf]
  %v1655 = vlaneseq
  %v1656 = vshrl.u32 %v1655, 7
  %v1657 = vsub.s32 0, %v1656
  %v1658 = vrot.slane %v1653, %v1657
  %v1659 = vlaneseq
  %v1660 = vshrl.u32 %v1659, 7
  %v1661 = vsub.s32 1, %v1660
  %v1662 = vrot.slane %v1653, %v1661
  %v1663 = vlaneseq
  %v1664 = vshrl.u32 %v1663, 7
  %v1665 = vsub.s32 2, %v1664
  %v1666 = vrot.slane %v1653, %v1665
  %v1667 = vlaneseq
  %v1668 = vshrl.u32 %v1667, 7
  %v1669 = vsub.s32 3, %v1668
  %v1670 = vrot.slane %v1653, %v1669
  %v1675 = vmul.f32 %v1652, %v1658
  %v1676 = vmul.f32 %v1651, %v1662
  %v1677 = vmul.f32 %v1650, %v1666
  %v1678 = vmul.f32 %v1649, %v1670
  %1679 = vst [vmem:[#allocation2 + $0x40] sm:$0xff] %v1675
  %1680 = vst [vmem:[#allocation2 + $0x48] sm:$0xff] %v1676
  %1681 = vst [vmem:[#allocation2 + $0x50] sm:$0xff] %v1677
  %1682 = vst [vmem:[#allocation2 + $0x58] sm:$0xff] %v1678
  %1683 = vrot.lane.b32.xlu0 %v1553, 1
  %v1684 = vpop.permute.xlu0 %1683
  %1685 = vrot.lane.b32.xlu0 %v1554, 1
  %v1686 = vpop.permute.xlu0 %1685
  %1687 = vrot.lane.b32.xlu0 %v1555, 1
  %v1688 = vpop.permute.xlu0 %1687
  %1689 = vrot.lane.b32.xlu0 %v1556, 1
  %v1690 = vpop.permute.xlu0 %1689
  %v1691 = vsel %vm163, %v1688, %v1690
  %v1692 = vsel %vm163, %v1686, %v1688
  %v1693 = vsel %vm163, %v1684, %v1686
  %v1694 = vsel %vm163, %v1690, %v1684
  %v1695 = vld [vmem:[%s168] ss:$8 sm:$0xf]
  %v1697 = vlaneseq
  %v1698 = vshrl.u32 %v1697, 7
  %v1699 = vsub.s32 0, %v1698
  %v1700 = vrot.slane %v1695, %v1699
  %v1701 = vlaneseq
  %v1702 = vshrl.u32 %v1701, 7
  %v1703 = vsub.s32 1, %v1702
  %v1704 = vrot.slane %v1695, %v1703
  %v1705 = vlaneseq
  %v1706 = vshrl.u32 %v1705, 7
  %v1707 = vsub.s32 2, %v1706
  %v1708 = vrot.slane %v1695, %v1707
  %v1709 = vlaneseq
  %v1710 = vshrl.u32 %v1709, 7
  %v1711 = vsub.s32 3, %v1710
  %v1712 = vrot.slane %v1695, %v1711
  %v1717 = vmul.f32 %v1694, %v1700
  %v1718 = vmul.f32 %v1693, %v1704
  %v1719 = vmul.f32 %v1692, %v1708
  %v1720 = vmul.f32 %v1691, %v1712
  %1721 = vst [vmem:[#allocation2 + $0x60] sm:$0xff] %v1717
  %1722 = vst [vmem:[#allocation2 + $0x68] sm:$0xff] %v1718
  %1723 = vst [vmem:[#allocation2 + $0x70] sm:$0xff] %v1719
  %1724 = vst [vmem:[#allocation2 + $0x78] sm:$0xff] %v1720
  %1725 = vst [vmem:[#allocation2 + $0x80] sm:$0xff] %v1553
  %1726 = vst [vmem:[#allocation2 + $0x88] sm:$0xff] %v1554
  %1727 = vst [vmem:[#allocation2 + $0x90] sm:$0xff] %v1555
  %1728 = vst [vmem:[#allocation2 + $0x98] sm:$0xff] %v1556
  %1729 = vrot.lane.b32.xlu0 %v1553, 127
  %v1730 = vpop.permute.xlu0 %1729
  %1731 = vrot.lane.b32.xlu0 %v1554, 127
  %v1732 = vpop.permute.xlu0 %1731
  %1733 = vrot.lane.b32.xlu0 %v1555, 127
  %v1734 = vpop.permute.xlu0 %1733
  %1735 = vrot.lane.b32.xlu0 %v1556, 127
  %v1736 = vpop.permute.xlu0 %1735
  %v1737 = vsel %vm211, %v1734, %v1736
  %v1738 = vsel %vm211, %v1732, %v1734
  %v1739 = vsel %vm211, %v1730, %v1732
  %v1740 = vsel %vm211, %v1736, %v1730
  %v1741 = vld [vmem:[%s216] ss:$8 sm:$0xf]
  %v1743 = vlaneseq
  %v1744 = vshrl.u32 %v1743, 7
  %v1745 = vsub.s32 0, %v1744
  %v1746 = vrot.slane %v1741, %v1745
  %v1747 = vlaneseq
  %v1748 = vshrl.u32 %v1747, 7
  %v1749 = vsub.s32 1, %v1748
  %v1750 = vrot.slane %v1741, %v1749
  %v1751 = vlaneseq
  %v1752 = vshrl.u32 %v1751, 7
  %v1753 = vsub.s32 2, %v1752
  %v1754 = vrot.slane %v1741, %v1753
  %v1755 = vlaneseq
  %v1756 = vshrl.u32 %v1755, 7
  %v1757 = vsub.s32 3, %v1756
  %v1758 = vrot.slane %v1741, %v1757
  %v1763 = vmul.f32 %v1739, %v1746
  %v1764 = vmul.f32 %v1738, %v1750
  %v1765 = vmul.f32 %v1737, %v1754
  %v1766 = vmul.f32 %v1740, %v1758
  %1767 = vst [vmem:[#allocation2 + $0xa0] sm:$0xff] %v1763
  %1768 = vst [vmem:[#allocation2 + $0xa8] sm:$0xff] %v1764
  %1769 = vst [vmem:[#allocation2 + $0xb0] sm:$0xff] %v1765
  %1770 = vst [vmem:[#allocation2 + $0xb8] sm:$0xff] %v1766
  %1771 = vrot.lane.b32.xlu0 %v1553, 113
  %v1772 = vpop.permute.xlu0 %1771
  %1773 = vrot.lane.b32.xlu0 %v1554, 113
  %v1774 = vpop.permute.xlu0 %1773
  %1775 = vrot.lane.b32.xlu0 %v1555, 113
  %v1776 = vpop.permute.xlu0 %1775
  %1777 = vrot.lane.b32.xlu0 %v1556, 113
  %v1778 = vpop.permute.xlu0 %1777
  %v1779 = vsel %vm255, %v1776, %v1778
  %v1780 = vsel %vm255, %v1774, %v1776
  %v1781 = vsel %vm255, %v1772, %v1774
  %v1782 = vsel %vm255, %v1778, %v1772
  %v1783 = vld [vmem:[%s260] ss:$8 sm:$0xf]
  %v1785 = vlaneseq
  %v1786 = vshrl.u32 %v1785, 7
  %v1787 = vsub.s32 0, %v1786
  %v1788 = vrot.slane %v1783, %v1787
  %v1789 = vlaneseq
  %v1790 = vshrl.u32 %v1789, 7
  %v1791 = vsub.s32 1, %v1790
  %v1792 = vrot.slane %v1783, %v1791
  %v1793 = vlaneseq
  %v1794 = vshrl.u32 %v1793, 7
  %v1795 = vsub.s32 2, %v1794
  %v1796 = vrot.slane %v1783, %v1795
  %v1797 = vlaneseq
  %v1798 = vshrl.u32 %v1797, 7
  %v1799 = vsub.s32 3, %v1798
  %v1800 = vrot.slane %v1783, %v1799
  %v1805 = vmul.f32 %v1781, %v1788
  %v1806 = vmul.f32 %v1780, %v1792
  %v1807 = vmul.f32 %v1779, %v1796
  %v1808 = vmul.f32 %v1782, %v1800
  %1809 = vst [vmem:[#allocation2 + $0xc0] sm:$0xff] %v1805
  %1810 = vst [vmem:[#allocation2 + $0xc8] sm:$0xff] %v1806
  %1811 = vst [vmem:[#allocation2 + $0xd0] sm:$0xff] %v1807
  %1812 = vst [vmem:[#allocation2 + $0xd8] sm:$0xff] %v1808
  %1813 = vrot.lane.b32.xlu0 %v1553, 112
  %v1814 = vpop.permute.xlu0 %1813
  %1815 = vrot.lane.b32.xlu0 %v1554, 112
  %v1816 = vpop.permute.xlu0 %1815
  %1817 = vrot.lane.b32.xlu0 %v1555, 112
  %v1818 = vpop.permute.xlu0 %1817
  %1819 = vrot.lane.b32.xlu0 %v1556, 112
  %v1820 = vpop.permute.xlu0 %1819
  %v1821 = vsel %vm299, %v1818, %v1820
  %v1822 = vsel %vm299, %v1816, %v1818
  %v1823 = vsel %vm299, %v1814, %v1816
  %v1824 = vsel %vm299, %v1820, %v1814
  %v1825 = vld [vmem:[%s304] ss:$8 sm:$0xf]
  %v1827 = vlaneseq
  %v1828 = vshrl.u32 %v1827, 7
  %v1829 = vsub.s32 0, %v1828
  %v1830 = vrot.slane %v1825, %v1829
  %v1831 = vlaneseq
  %v1832 = vshrl.u32 %v1831, 7
  %v1833 = vsub.s32 1, %v1832
  %v1834 = vrot.slane %v1825, %v1833
  %v1835 = vlaneseq
  %v1836 = vshrl.u32 %v1835, 7
  %v1837 = vsub.s32 2, %v1836
  %v1838 = vrot.slane %v1825, %v1837
  %v1839 = vlaneseq
  %v1840 = vshrl.u32 %v1839, 7
  %v1841 = vsub.s32 3, %v1840
  %v1842 = vrot.slane %v1825, %v1841
  %v1847 = vmul.f32 %v1823, %v1830
  %v1848 = vmul.f32 %v1822, %v1834
  %v1849 = vmul.f32 %v1821, %v1838
  %v1850 = vmul.f32 %v1824, %v1842
  %1851 = vst [vmem:[#allocation2 + $0xe0] sm:$0xff] %v1847
  %1852 = vst [vmem:[#allocation2 + $0xe8] sm:$0xff] %v1848
  %1853 = vst [vmem:[#allocation2 + $0xf0] sm:$0xff] %v1849
  %1854 = vst [vmem:[#allocation2 + $0xf8] sm:$0xff] %v1850
  %1855 = vrot.lane.b32.xlu0 %v1553, 111
  %v1856 = vpop.permute.xlu0 %1855
  %1857 = vrot.lane.b32.xlu0 %v1554, 111
  %v1858 = vpop.permute.xlu0 %1857
  %1859 = vrot.lane.b32.xlu0 %v1555, 111
  %v1860 = vpop.permute.xlu0 %1859
  %1861 = vrot.lane.b32.xlu0 %v1556, 111
  %v1862 = vpop.permute.xlu0 %1861
  %v1863 = vsel %vm343, %v1860, %v1862
  %v1864 = vsel %vm343, %v1858, %v1860
  %v1865 = vsel %vm343, %v1856, %v1858
  %v1866 = vsel %vm343, %v1862, %v1856
  %v1867 = vld [vmem:[%s348] ss:$8 sm:$0xf]
  %v1869 = vlaneseq
  %v1870 = vshrl.u32 %v1869, 7
  %v1871 = vsub.s32 0, %v1870
  %v1872 = vrot.slane %v1867, %v1871
  %v1873 = vlaneseq
  %v1874 = vshrl.u32 %v1873, 7
  %v1875 = vsub.s32 1, %v1874
  %v1876 = vrot.slane %v1867, %v1875
  %v1877 = vlaneseq
  %v1878 = vshrl.u32 %v1877, 7
  %v1879 = vsub.s32 2, %v1878
  %v1880 = vrot.slane %v1867, %v1879
  %v1881 = vlaneseq
  %v1882 = vshrl.u32 %v1881, 7
  %v1883 = vsub.s32 3, %v1882
  %v1884 = vrot.slane %v1867, %v1883
  %v1889 = vmul.f32 %v1865, %v1872
  %v1890 = vmul.f32 %v1864, %v1876
  %v1891 = vmul.f32 %v1863, %v1880
  %v1892 = vmul.f32 %v1866, %v1884
  %1893 = vst [vmem:[#allocation2 + $0x100] sm:$0xff] %v1889
  %1894 = vst [vmem:[#allocation2 + $0x108] sm:$0xff] %v1890
  %1895 = vst [vmem:[#allocation2 + $0x110] sm:$0xff] %v1891
  %1896 = vst [vmem:[#allocation2 + $0x118] sm:$0xff] %v1892
  %v1897 = vld [vmem:[#allocation2] sm:$0xff]
  %v1898 = vld [vmem:[#allocation2 + $0x8] sm:$0xff]
  %v1899 = vld [vmem:[#allocation2 + $0x10] sm:$0xff]
  %v1900 = vld [vmem:[#allocation2 + $0x18] sm:$0xff]
  %v1901 = vld [vmem:[#allocation2 + $0x20] sm:$0xff]
  %v1902 = vld [vmem:[#allocation2 + $0x28] sm:$0xff]
  %v1903 = vld [vmem:[#allocation2 + $0x30] sm:$0xff]
  %v1904 = vld [vmem:[#allocation2 + $0x38] sm:$0xff]
  %v1905 = vld [vmem:[#allocation2 + $0x40] sm:$0xff]
  %v1906 = vld [vmem:[#allocation2 + $0x48] sm:$0xff]
  %v1907 = vld [vmem:[#allocation2 + $0x50] sm:$0xff]
  %v1908 = vld [vmem:[#allocation2 + $0x58] sm:$0xff]
  %v1909 = vld [vmem:[#allocation2 + $0x60] sm:$0xff]
  %v1910 = vld [vmem:[#allocation2 + $0x68] sm:$0xff]
  %v1911 = vld [vmem:[#allocation2 + $0x70] sm:$0xff]
  %v1912 = vld [vmem:[#allocation2 + $0x78] sm:$0xff]
  %v1913 = vld [vmem:[#allocation2 + $0x80] sm:$0xff]
  %v1914 = vld [vmem:[#allocation2 + $0x88] sm:$0xff]
  %v1915 = vld [vmem:[#allocation2 + $0x90] sm:$0xff]
  %v1916 = vld [vmem:[#allocation2 + $0x98] sm:$0xff]
  %v1917 = vld [vmem:[#allocation2 + $0xa0] sm:$0xff]
  %v1918 = vld [vmem:[#allocation2 + $0xa8] sm:$0xff]
  %v1919 = vld [vmem:[#allocation2 + $0xb0] sm:$0xff]
  %v1920 = vld [vmem:[#allocation2 + $0xb8] sm:$0xff]
  %v1921 = vld [vmem:[#allocation2 + $0xc0] sm:$0xff]
  %v1922 = vld [vmem:[#allocation2 + $0xc8] sm:$0xff]
  %v1923 = vld [vmem:[#allocation2 + $0xd0] sm:$0xff]
  %v1924 = vld [vmem:[#allocation2 + $0xd8] sm:$0xff]
  %v1925 = vld [vmem:[#allocation2 + $0xe0] sm:$0xff]
  %v1926 = vld [vmem:[#allocation2 + $0xe8] sm:$0xff]
  %v1927 = vld [vmem:[#allocation2 + $0xf0] sm:$0xff]
  %v1928 = vld [vmem:[#allocation2 + $0xf8] sm:$0xff]
  %v1929 = vld [vmem:[#allocation2 + $0x100] sm:$0xff]
  %v1930 = vld [vmem:[#allocation2 + $0x108] sm:$0xff]
  %v1931 = vld [vmem:[#allocation2 + $0x110] sm:$0xff]
  %v1932 = vld [vmem:[#allocation2 + $0x118] sm:$0xff]
  %v1933 = vpack.c.bf16 %v1901, %v1897
  %v1934 = vpack.c.bf16 %v1902, %v1898
  %v1935 = vpack.c.bf16 %v1903, %v1899
  %v1936 = vpack.c.bf16 %v1904, %v1900
  %v1937 = vpack.c.bf16 %v1909, %v1905
  %v1938 = vpack.c.bf16 %v1910, %v1906
  %v1939 = vpack.c.bf16 %v1911, %v1907
  %v1940 = vpack.c.bf16 %v1912, %v1908
  %v1941 = vpack.c.bf16 %v1917, %v1913
  %v1942 = vpack.c.bf16 %v1918, %v1914
  %v1943 = vpack.c.bf16 %v1919, %v1915
  %v1944 = vpack.c.bf16 %v1920, %v1916
  %v1945 = vpack.c.bf16 %v1925, %v1921
  %v1946 = vpack.c.bf16 %v1926, %v1922
  %v1947 = vpack.c.bf16 %v1927, %v1923
  %v1948 = vpack.c.bf16 %v1928, %v1924
  %v1949 = vpack.c.bf16 %v1929, %v1929
  %v1950 = vpack.c.bf16 %v1930, %v1930
  %v1951 = vpack.c.bf16 %v1931, %v1931
  %v1952 = vpack.c.bf16 %v1932, %v1932
  %s1953 = scalar_lea.vmem %s2, 12
  %v1954 = vld [vmem:[%s1953] sm:$0xf]
  %s1955 = scalar_lea.vmem %s3, 24
  %v1956 = vld [vmem:[%s1955] sm:$0xff]
  %1958 = vset.pattern.permute.xlu0 0
  %1959 = vperm.xlu0 %1958, %v1956
  %v1960 = vpop.permute.xlu0 %1959
  %v1963 = vsel %vm442, %v1954, 0
  %v1966 = vsel %vm446, %v1949, 0
  %v1969 = vsel %vm446, %v1950, 0
  %v1972 = vsel %vm446, %v1951, 0
  %v1975 = vsel %vm446, %v1952, 0
  %1977 = vmatprep.subr.bf16.mxu0 0
  %1978 = vmatpush1.bf16.msra.mxu0 0
  %1979 = vmatprep.subr.bf16.mxu0 0
  %1980 = vmatpush1.bf16.msra.mxu0 0
  %1981 = vmatprep.subr.bf16.mxu0 0
  %1982 = vmatpush1.bf16.msra.mxu0 0
  %1983 = vmatprep.subr.bf16.mxu0 %v1969
  %1984 = vmatpush1.bf16.msra.mxu0 %v1966
  %1985 = vmatprep.subr.bf16.mxu0 %v1946
  %1986 = vmatpush1.bf16.msra.mxu0 %v1945
  %1987 = vmatprep.subr.bf16.mxu0 %v1942
  %1988 = vmatpush1.bf16.msra.mxu0 %v1941
  %1989 = vmatprep.subr.bf16.mxu0 %v1938
  %1990 = vmatpush1.bf16.msra.mxu0 %v1937
  %1991 = vmatprep.subr.bf16.mxu0 %v1934
  %1992 = vmatpush1.bf16.msra.mxu0 %v1933
  %1993 = vmatprep.subr.bf16.mxu0 0
  %1994 = vmatpush2.bf16.msra.mxu0 0
  %1995 = vmatprep.subr.bf16.mxu0 0
  %1996 = vmatpush2.bf16.msra.mxu0 0
  %1997 = vmatprep.subr.bf16.mxu0 0
  %1998 = vmatpush2.bf16.msra.mxu0 0
  %1999 = vmatprep.subr.bf16.mxu0 0
  %2000 = vmatpush2.bf16.msra.mxu0 0
  %2001 = vmatprep.subr.bf16.mxu0 0
  %2002 = vmatpush2.bf16.msra.mxu0 0
  %2003 = vmatprep.subr.bf16.mxu0 0
  %2004 = vmatpush2.bf16.msra.mxu0 0
  %2005 = vmatprep.subr.bf16.mxu0 0
  %2006 = vmatpush2.bf16.msra.mxu0 0
  %2007 = vmatprep.subr.bf16.mxu0 0
  %2008 = vmatpush2.bf16.msra.mxu0 0
  %2009 = vmatprep.mubr.bf16.mxu0 0
  %2010 = vmatmul.mubr.bf16.gmra.mxu0 %v1963
  %v2011 = vpop.f32.mrf.mxu0
  %v2012 = vadd.f32 %v1960, %v2011
  %v2013 = vpop.f32.mrf.mxu0
  %v2014 = vadd.f32 %v1960, %v2013
  %v2015 = vpop.f32.mrf.mxu0
  %v2016 = vpop.f32.mrf.mxu0
  %2017 = vdwg.mxu0
  %2018 = vmatprep.subr.bf16.mxu0 0
  %2019 = vmatpush1.bf16.msra.mxu0 0
  %2020 = vmatprep.subr.bf16.mxu0 0
  %2021 = vmatpush1.bf16.msra.mxu0 0
  %2022 = vmatprep.subr.bf16.mxu0 0
  %2023 = vmatpush1.bf16.msra.mxu0 0
  %2024 = vmatprep.subr.bf16.mxu0 %v1975
  %2025 = vmatpush1.bf16.msra.mxu0 %v1972
  %2026 = vmatprep.subr.bf16.mxu0 %v1948
  %2027 = vmatpush1.bf16.msra.mxu0 %v1947
  %2028 = vmatprep.subr.bf16.mxu0 %v1944
  %2029 = vmatpush1.bf16.msra.mxu0 %v1943
  %2030 = vmatprep.subr.bf16.mxu0 %v1940
  %2031 = vmatpush1.bf16.msra.mxu0 %v1939
  %2032 = vmatprep.subr.bf16.mxu0 %v1936
  %2033 = vmatpush1.bf16.msra.mxu0 %v1935
  %2034 = vmatprep.subr.bf16.mxu0 0
  %2035 = vmatpush2.bf16.msra.mxu0 0
  %2036 = vmatprep.subr.bf16.mxu0 0
  %2037 = vmatpush2.bf16.msra.mxu0 0
  %2038 = vmatprep.subr.bf16.mxu0 0
  %2039 = vmatpush2.bf16.msra.mxu0 0
  %2040 = vmatprep.subr.bf16.mxu0 0
  %2041 = vmatpush2.bf16.msra.mxu0 0
  %2042 = vmatprep.subr.bf16.mxu0 0
  %2043 = vmatpush2.bf16.msra.mxu0 0
  %2044 = vmatprep.subr.bf16.mxu0 0
  %2045 = vmatpush2.bf16.msra.mxu0 0
  %2046 = vmatprep.subr.bf16.mxu0 0
  %2047 = vmatpush2.bf16.msra.mxu0 0
  %2048 = vmatprep.subr.bf16.mxu0 0
  %2049 = vmatpush2.bf16.msra.mxu0 0
  %2050 = vmatprep.mubr.bf16.mxu0 0
  %2051 = vmatmul.mubr.bf16.gmra.mxu0 %v1963
  %v2052 = vpop.f32.mrf.mxu0
  %v2053 = vadd.f32 %v1960, %v2052
  %v2054 = vpop.f32.mrf.mxu0
  %v2055 = vadd.f32 %v1960, %v2054
  %v2056 = vpop.f32.mrf.mxu0
  %v2057 = vpop.f32.mrf.mxu0
  %2058 = vdwg.mxu0
  %v2059 = vmax.f32 %v2012, 0.0
  %v2060 = vmax.f32 %v2014, 0.0
  %v2061 = vmax.f32 %v2053, 0.0
  %v2062 = vmax.f32 %v2055, 0.0
  %2063 = vst [vmem:[%s4] sm:$0xff] %v2059
  %2064 = vst [vmem:[%s4 + $0x8] sm:$0xff] %v2060
  %2065 = vst [vmem:[%s4 + $0x10] sm:$0xff] %v2061
  %2066 = vst [vmem:[%s4 + $0x18] sm:$0xff] %v2062
  // Predicated region
  $region18: #{fusion0_forward.1} parent=0 // pred_check
    _
  $region19: #{fusion0_forward.1} parent=0 // pred_check_branch
    %2068 = sbr.rel (0) target = $region21
  $region20: #{fusion0_forward.1} parent=0 // pred_region
    _
  $region21: #{fusion0_forward.1} parent=0 // pred_fallthru
    _
  // Predicated region
  $region22: #{fusion0_forward.1} parent=0 // pred_check
    _
  $region23: #{fusion0_forward.1} parent=0 // pred_check_branch
    %2070 = sbr.rel (0) target = $region25
  $region24: #{fusion0_forward.1} parent=0 // pred_region
    _
  $region25: #{fusion0_forward.1} parent=0 // pred_fallthru
    _

</llo_original>
